<compile_context>
chip_gen: v5e
topology: v5e:2x2
jax: 0.10.0
libtpu: 0.0.40
codegen_flags: <defaults>
</compile_context>

<pallas_src>
import functools
import math

import jax
import jax.numpy as jnp
from jax import lax
from jax.experimental import pallas as pl
from jax.experimental.pallas import tpu as pltpu


def _layer_norm_f32(x, scale, shift, eps):
    """LayerNorm matching the torch module: x.var() default => unbiased (ddof=1)."""
    d = x.shape[-1]
    mean = jnp.mean(x, axis=-1, keepdims=True)
    centered = x - mean
    var = jnp.sum(centered * centered, axis=-1, keepdims=True) * (1.0 / (d - 1))
    inv = lax.rsqrt(var + eps)
    return centered * inv * scale + shift


def _transformer_block_kernel(xq_ref, xf_ref, wq_ref, wkv_ref, wo_ref,
                              w1_ref, b1_ref, w2_ref, b2_ref,
                              ln1_s_ref, ln1_b_ref, ln2_s_ref, ln2_b_ref,
                              o_ref,
                              q_scr, k_scr, v_scr, acc_scr,
                              *, num_heads, head_dim, eps):
    f32 = jnp.float32
    bf16 = jnp.bfloat16

    tq = xq_ref.shape[1]          # query-tile length
    T = xf_ref.shape[1]           # full sequence length
    D = xq_ref.shape[2]
    qt = pl.program_id(1)

    # ------- K/V for the whole batch row: computed once (qt == 0), kept in
    #         head-major bf16 VMEM scratch across all query tiles. -------
    @pl.when(qt == 0)
    def _compute_kv():
        hf = _layer_norm_f32(xf_ref[0], ln1_s_ref[...], ln1_b_ref[...], eps)
        kv = jnp.dot(hf.astype(bf16), wkv_ref[...], preferred_element_type=f32)
        for h in range(num_heads):            # cheap static head-split copies
            lo = h * head_dim
            k_scr[h] = kv[:, lo:lo + head_dim].astype(bf16)
            v_scr[h] = kv[:, D + lo:D + lo + head_dim].astype(bf16)

    # ------- LayerNorm1 + Q projection for this query tile -------
    xq = xq_ref[0]                                          # (tq, D) f32
    hq = _layer_norm_f32(xq, ln1_s_ref[...], ln1_b_ref[...], eps)
    scale = 1.0 / math.sqrt(head_dim)
    qv = jnp.dot(hq.astype(bf16), wq_ref[...],
                 preferred_element_type=f32) * scale        # fold 1/sqrt(hd) in
    for h in range(num_heads):
        lo = h * head_dim
        q_scr[h] = qv[:, lo:lo + head_dim].astype(bf16)

    # ------- Per-tile causal mask, built in-kernel (no HBM mask, no (T,T)) --
    q_start = qt * tq
    row = lax.broadcasted_iota(jnp.int32, (tq, T), 0) + q_start
    col = lax.broadcasted_iota(jnp.int32, (tq, T), 1)
    future = col > row
    neg_big = jnp.float32(-1e30)                            # finite, robust vs -inf

    # ------- Attention + output projection: fori_loop over heads -------
    acc_scr[...] = jnp.zeros_like(acc_scr)

    def head_body(h, carry):
        qh = q_scr[h]                                       # (tq, hd) bf16
        kh = k_scr[h]                                       # (T, hd)  bf16
        vh = v_scr[h]                                       # (T, hd)  bf16
        s = lax.dot_general(qh, kh, (((1,), (1,)), ((), ())),
                            preferred_element_type=f32)     # (tq, T)
        s = jnp.where(future, neg_big, s)
        m = jnp.max(s, axis=-1, keepdims=True)
        p = jnp.exp(s - m)
        denom = jnp.sum(p, axis=-1, keepdims=True)
        # TODO(synk): attention-weight dropout applied as identity (p=0 / eval).
        ctx = jnp.dot(p.astype(bf16), vh, preferred_element_type=f32)  # (tq, hd)
        ctx = ctx * pl.reciprocal(denom, approx=True)       # normalize AFTER PV
        # Per-head slice of out_proj -> lane-dense (tq, D) accumulation,
        # no head-merge / sub-128-lane stores needed.
        acc_scr[...] += jnp.dot(ctx.astype(bf16), wo_ref[h],
                                preferred_element_type=f32)
        return carry

    lax.fori_loop(0, num_heads, head_body, jnp.int32(0))

    # ------- Residual 1, LayerNorm2, feed-forward, residual 2 -------
    # TODO(synk): drop_shortcut dropout applied as identity (p=0 / eval).
    x1 = xq + acc_scr[...]
    h2 = _layer_norm_f32(x1, ln2_s_ref[...], ln2_b_ref[...], eps)
    ff1 = jnp.dot(h2.astype(bf16), w1_ref[...],
                  preferred_element_type=f32) + b1_ref[...]
    c = math.sqrt(2.0 / math.pi)
    g = 0.5 * ff1 * (1.0 + jnp.tanh(c * (ff1 + 0.044715 * ff1 * ff1 * ff1)))
    ff2 = jnp.dot(g.astype(bf16), w2_ref[...],
                  preferred_element_type=f32) + b2_ref[...]
    o_ref[0] = x1 + ff2


def pack_transformer_block_params(wq, wk, wv, wo, ln1_scale, ln1_shift,
                                  ln2_scale, ln2_shift, w1, b1, w2, b2,
                                  *, num_heads):
    """One-time weight packing, hoisted out of the per-call wrapper.

    Fuses W_k|W_v, pre-casts matmul operands to bf16, and reshapes out_proj to
    head-major (H, head_dim, D) so the kernel indexes it by a traced head id.
    """
    d_in, d_out = wq.shape
    assert d_out % num_heads == 0, "d_out must be divisible by num_heads"
    head_dim = d_out // num_heads
    return dict(
        num_heads=int(num_heads),
        wq=wq.astype(jnp.bfloat16),
        wkv=jnp.concatenate([wk, wv], axis=1).astype(jnp.bfloat16),
        wo=wo.astype(jnp.bfloat16).reshape(num_heads, head_dim, d_out),
        w1=w1.astype(jnp.bfloat16),
        b1=b1.reshape(1, -1).astype(jnp.float32),
        w2=w2.astype(jnp.bfloat16),
        b2=b2.reshape(1, -1).astype(jnp.float32),
        ln1_s=ln1_scale.reshape(1, -1).astype(jnp.float32),
        ln1_b=ln1_shift.reshape(1, -1).astype(jnp.float32),
        ln2_s=ln2_scale.reshape(1, -1).astype(jnp.float32),
        ln2_b=ln2_shift.reshape(1, -1).astype(jnp.float32),
    )


def _default_vmem_limit_bytes():
    """Generation-aware VMEM cap: leave headroom on v7x (64 MiB physical),
    use more of v5e/v6e's 128 MiB. Older gens keep the compiler default."""
    kind = jax.devices()[0].device_kind.lower()
    if "v2" in kind or "v3" in kind:
        return None
    if "7" in kind:                        # v7x
        return 48 * 1024 * 1024
    return 100 * 1024 * 1024               # v4 / v5e / v5p / v6e


def transformer_block(x, params, *, q_tile=128, eps=1e-5, vmem_limit_bytes=None):
    B, T, D = x.shape
    num_heads = int(params["num_heads"])
    assert D % num_heads == 0
    head_dim = D // num_heads
    hidden = params["w1"].shape[1]

    tq = min(q_tile, T)
    assert T % tq == 0, "sequence length must be divisible by the query tile"
    nq = T // tq

    if vmem_limit_bytes is None:
        vmem_limit_bytes = _default_vmem_limit_bytes()

    kernel = functools.partial(_transformer_block_kernel,
                               num_heads=num_heads, head_dim=head_dim, eps=eps)

    def wmap2(b, q):
        return (0, 0)

    def wmap3(b, q):
        return (0, 0, 0)

    grid_spec = pltpu.PrefetchScalarGridSpec(
        num_scalar_prefetch=0,
        grid=(B, nq),
        in_specs=[
            pl.BlockSpec((1, tq, D), lambda b, q: (b, q, 0)),   # x, query tile
            pl.BlockSpec((1, T, D), lambda b, q: (b, 0, 0)),    # x, full row (K/V)
            pl.BlockSpec((D, D), wmap2),                        # W_q
            pl.BlockSpec((D, 2 * D), wmap2),                    # W_k | W_v fused
            pl.BlockSpec((num_heads, head_dim, D), wmap3),      # out_proj, head-major
            pl.BlockSpec((D, hidden), wmap2),                   # ff W1
            pl.BlockSpec((1, hidden), wmap2),                   # ff b1
            pl.BlockSpec((hidden, D), wmap2),                   # ff W2
            pl.BlockSpec((1, D), wmap2),                        # ff b2
            pl.BlockSpec((1, D), wmap2),                        # ln1 scale
            pl.BlockSpec((1, D), wmap2),                        # ln1 shift
            pl.BlockSpec((1, D), wmap2),                        # ln2 scale
            pl.BlockSpec((1, D), wmap2),                        # ln2 shift
        ],
        out_specs=pl.BlockSpec((1, tq, D), lambda b, q: (b, q, 0)),
        scratch_shapes=[
            pltpu.VMEM((num_heads, tq, head_dim), jnp.bfloat16),  # Q, head-major
            pltpu.VMEM((num_heads, T, head_dim), jnp.bfloat16),   # K, head-major
            pltpu.VMEM((num_heads, T, head_dim), jnp.bfloat16),   # V, head-major
            pltpu.VMEM((tq, D), jnp.float32),                     # attn-out accum
        ],
    )

    x_f32 = x.astype(jnp.float32)
    return pl.pallas_call(
        kernel,
        out_shape=jax.ShapeDtypeStruct((B, T, D), jnp.float32),
        grid_spec=grid_spec,
        compiler_params=pltpu.CompilerParams(
            dimension_semantics=("parallel", "arbitrary"),
            vmem_limit_bytes=vmem_limit_bytes,
        ),
    )(x_f32, x_f32,
      params["wq"], params["wkv"], params["wo"],
      params["w1"], params["b1"], params["w2"], params["b2"],
      params["ln1_s"], params["ln1_b"], params["ln2_s"], params["ln2_b"])


def _reference_block(x, wq, wk, wv, wo, ln1_scale, ln1_shift,
                     ln2_scale, ln2_shift, w1, b1, w2, b2,
                     *, num_heads, eps=1e-5):
    """Pure-JAX f32 reference matching the PyTorch TransformerBlock forward."""
    B, T, D = x.shape
    hd = D // num_heads

    def ln(v, s, b):
        mean = v.mean(axis=-1, keepdims=True)
        var = jnp.var(v, axis=-1, keepdims=True, ddof=1)   # torch x.var() default
        return s * (v - mean) / jnp.sqrt(var + eps) + b

    h = ln(x, ln1_scale, ln1_shift)
    q = (h @ wq).reshape(B, T, num_heads, hd).transpose(0, 2, 1, 3)
    k = (h @ wk).reshape(B, T, num_heads, hd).transpose(0, 2, 1, 3)
    v = (h @ wv).reshape(B, T, num_heads, hd).transpose(0, 2, 1, 3)
    scores = jnp.einsum("bhqd,bhkd->bhqk", q, k)
    mask = jnp.triu(jnp.ones((T, T), bool), k=1)
    scores = jnp.where(mask[None, None], -jnp.inf, scores) / (hd ** 0.5)
    w = jax.nn.softmax(scores, axis=-1)
    ctx = jnp.einsum("bhqk,bhkd->bhqd", w, v).transpose(0, 2, 1, 3).reshape(B, T, D)
    x = x + ctx @ wo
    h2 = ln(x, ln2_scale, ln2_shift)
    ff1 = h2 @ w1 + b1
    g = 0.5 * ff1 * (1.0 + jnp.tanh(jnp.sqrt(2.0 / jnp.pi) *
                                    (ff1 + 0.044715 * ff1 ** 3)))
    return x + (g @ w2 + b2)


if __name__ == "__main__":
    # GPT-style config at small, module-consistent shapes.
    B, T = 2, 8                    # batch, seq (== context_length)
    emb_dim = 32                   # d_in == d_out
    num_heads = 4                  # head_dim = 8
    hidden = 4 * emb_dim           # feed-forward hidden width

    key = jax.random.PRNGKey(0)
    (kx, kq, kk, kv, ko, k1, kb1, k2, kb2,
     kls1, klb1, kls2, klb2) = jax.random.split(key, 13)

    x = jax.random.normal(kx, (B, T, emb_dim), dtype=jnp.float32)

    # attention params: torch.rand-style uniform [0, 1)
    wq = jax.random.uniform(kq, (emb_dim, emb_dim), dtype=jnp.float32)
    wk = jax.random.uniform(kk, (emb_dim, emb_dim), dtype=jnp.float32)
    wv = jax.random.uniform(kv, (emb_dim, emb_dim), dtype=jnp.float32)
    wo = jax.random.uniform(ko, (emb_dim, emb_dim), dtype=jnp.float32)

    # feed-forward params: nn.Linear-style uniform(-1/sqrt(fan_in), ...)
    lim1 = 1.0 / math.sqrt(emb_dim)
    lim2 = 1.0 / math.sqrt(hidden)
    w1 = jax.random.uniform(k1, (emb_dim, hidden), jnp.float32, -lim1, lim1)
    b1 = jax.random.uniform(kb1, (hidden,), jnp.float32, -lim1, lim1)
    w2 = jax.random.uniform(k2, (hidden, emb_dim), jnp.float32, -lim2, lim2)
    b2 = jax.random.uniform(kb2, (emb_dim,), jnp.float32, -lim2, lim2)

    # layernorm params (perturbed so scale/shift paths are exercised)
    ln1_scale = 1.0 + 0.1 * jax.random.normal(kls1, (emb_dim,), jnp.float32)
    ln1_shift = 0.1 * jax.random.normal(klb1, (emb_dim,), jnp.float32)
    ln2_scale = 1.0 + 0.1 * jax.random.normal(kls2, (emb_dim,), jnp.float32)
    ln2_shift = 0.1 * jax.random.normal(klb2, (emb_dim,), jnp.float32)

    # One-time weight packing (hoisted out of the forward path).
    params = pack_transformer_block_params(
        wq, wk, wv, wo, ln1_scale, ln1_shift, ln2_scale, ln2_shift,
        w1, b1, w2, b2, num_heads=num_heads)

    out = jax.block_until_ready(transformer_block(x, params, q_tile=128))

    ref = _reference_block(x, wq, wk, wv, wo, ln1_scale, ln1_shift,
                           ln2_scale, ln2_shift, w1, b1, w2, b2,
                           num_heads=num_heads)
    assert out.shape == ref.shape == (B, T, emb_dim)
    # bf16 matmul operands (f32 accumulation) vs f32 reference -> normalized
    # max-error tolerance.
    rel_err = jnp.max(jnp.abs(out - ref)) / (jnp.max(jnp.abs(ref)) + 1e-6)
    assert rel_err < 3e-2, f"mismatch vs reference: rel_err={rel_err}"
    print("KERNEL_OK")
</pallas_src>

<mosaic_0001>
module attributes {stable_mosaic.version = 11 : i64} {
  func.func @_transformer_block_kernel(%arg0: i32, %arg1: i32, %arg2: memref<1x8x32xf32, #tpu.memory_space<vmem>>, %arg3: memref<1x8x32xf32, #tpu.memory_space<vmem>>, %arg4: memref<32x32xbf16, #tpu.memory_space<vmem>>, %arg5: memref<32x64xbf16, #tpu.memory_space<vmem>>, %arg6: memref<4x8x32xbf16, #tpu.memory_space<vmem>>, %arg7: memref<32x128xbf16, #tpu.memory_space<vmem>>, %arg8: memref<1x128xf32, #tpu.memory_space<vmem>>, %arg9: memref<128x32xbf16, #tpu.memory_space<vmem>>, %arg10: memref<1x32xf32, #tpu.memory_space<vmem>>, %arg11: memref<1x32xf32, #tpu.memory_space<vmem>>, %arg12: memref<1x32xf32, #tpu.memory_space<vmem>>, %arg13: memref<1x32xf32, #tpu.memory_space<vmem>>, %arg14: memref<1x32xf32, #tpu.memory_space<vmem>>, %arg15: memref<1x8x32xf32, #tpu.memory_space<vmem>>, %arg16: memref<4x8x8xbf16, #tpu.memory_space<vmem>>, %arg17: memref<4x8x8xbf16, #tpu.memory_space<vmem>>, %arg18: memref<4x8x8xbf16, #tpu.memory_space<vmem>>, %arg19: memref<8x32xf32, #tpu.memory_space<vmem>>) attributes {dimension_semantics = [#tpu.dimension_semantics<parallel>, #tpu.dimension_semantics<arbitrary>], iteration_bounds = array<i64: 2, 1>, scalar_prefetch = 0 : i64, scratch_operands = 4 : i64, tpu.core_type = #tpu.core_type<tc>, window_params = [{transform_indices = @transform_0, window_bounds = array<i64: 1, 8, 32>}, {transform_indices = @transform_1, window_bounds = array<i64: 1, 8, 32>}, {pipeline_mode = #tpu.pipeline_mode<synchronous>, transform_indices = @transform_2, window_bounds = array<i64: 32, 32>}, {pipeline_mode = #tpu.pipeline_mode<synchronous>, transform_indices = @transform_3, window_bounds = array<i64: 32, 64>}, {pipeline_mode = #tpu.pipeline_mode<synchronous>, transform_indices = @transform_4, window_bounds = array<i64: 4, 8, 32>}, {pipeline_mode = #tpu.pipeline_mode<synchronous>, transform_indices = @transform_5, window_bounds = array<i64: 32, 128>}, {pipeline_mode = #tpu.pipeline_mode<synchronous>, transform_indices = @transform_6, window_bounds = array<i64: 1, 128>}, {pipeline_mode = #tpu.pipeline_mode<synchronous>, transform_indices = @transform_7, window_bounds = array<i64: 128, 32>}, {pipeline_mode = #tpu.pipeline_mode<synchronous>, transform_indices = @transform_8, window_bounds = array<i64: 1, 32>}, {pipeline_mode = #tpu.pipeline_mode<synchronous>, transform_indices = @transform_9, window_bounds = array<i64: 1, 32>}, {pipeline_mode = #tpu.pipeline_mode<synchronous>, transform_indices = @transform_10, window_bounds = array<i64: 1, 32>}, {pipeline_mode = #tpu.pipeline_mode<synchronous>, transform_indices = @transform_11, window_bounds = array<i64: 1, 32>}, {pipeline_mode = #tpu.pipeline_mode<synchronous>, transform_indices = @transform_12, window_bounds = array<i64: 1, 32>}, {transform_indices = @transform_13, window_bounds = array<i64: 1, 8, 32>}]} {
    %c0_i32 = arith.constant 0 : i32
    %0 = arith.cmpi eq, %arg1, %c0_i32 : i32
    %1 = arith.extui %0 : i1 to i32
    %c0_i32_0 = arith.constant 0 : i32
    %2 = arith.cmpi ne, %1, %c0_i32_0 : i32
    scf.if %2 {
      %c0_58 = arith.constant 0 : index
      %c0_59 = arith.constant 0 : index
      %c0_60 = arith.constant 0 : index
      %114 = vector.load %arg3[%c0_58, %c0_59, %c0_60] : memref<1x8x32xf32, #tpu.memory_space<vmem>>, vector<1x8x32xf32>
      %115 = vector.shape_cast %114 : vector<1x8x32xf32> to vector<8x32xf32>
      %c0_61 = arith.constant 0 : index
      %c0_62 = arith.constant 0 : index
      %116 = vector.load %arg11[%c0_61, %c0_62] : memref<1x32xf32, #tpu.memory_space<vmem>>, vector<1x32xf32>
      %c0_63 = arith.constant 0 : index
      %c0_64 = arith.constant 0 : index
      %117 = vector.load %arg12[%c0_63, %c0_64] : memref<1x32xf32, #tpu.memory_space<vmem>>, vector<1x32xf32>
      %cst_65 = arith.constant dense<0.000000e+00> : vector<8xf32>
      %118 = vector.multi_reduction <add>, %115, %cst_65 [1] : vector<8x32xf32> to vector<8xf32>
      %119 = vector.shape_cast %118 : vector<8xf32> to vector<8x1xf32>
      %cst_66 = arith.constant 3.200000e+01 : f32
      %120 = vector.broadcast %cst_66 : f32 to vector<8x1xf32>
      %121 = arith.divf %119, %120 : vector<8x1xf32>
      %122 = vector.broadcast %121 : vector<8x1xf32> to vector<8x32xf32>
      %123 = arith.subf %115, %122 : vector<8x32xf32>
      %124 = arith.mulf %123, %123 : vector<8x32xf32>
      %cst_67 = arith.constant dense<0.000000e+00> : vector<8xf32>
      %125 = vector.multi_reduction <add>, %124, %cst_67 [1] : vector<8x32xf32> to vector<8xf32>
      %126 = vector.shape_cast %125 : vector<8xf32> to vector<8x1xf32>
      %cst_68 = arith.constant 0.0322580636 : f32
      %127 = vector.broadcast %cst_68 : f32 to vector<8x1xf32>
      %128 = arith.mulf %126, %127 : vector<8x1xf32>
      %cst_69 = arith.constant 9.99999974E-6 : f32
      %129 = vector.broadcast %cst_69 : f32 to vector<8x1xf32>
      %130 = arith.addf %128, %129 : vector<8x1xf32>
      %131 = math.rsqrt %130 : vector<8x1xf32>
      %132 = vector.broadcast %131 : vector<8x1xf32> to vector<8x32xf32>
      %133 = arith.mulf %123, %132 : vector<8x32xf32>
      %134 = vector.broadcast %116 : vector<1x32xf32> to vector<8x32xf32>
      %135 = arith.mulf %133, %134 : vector<8x32xf32>
      %136 = vector.broadcast %117 : vector<1x32xf32> to vector<8x32xf32>
      %137 = arith.addf %135, %136 : vector<8x32xf32>
      %138 = arith.truncf %137 : vector<8x32xf32> to vector<8x32xbf16>
      %c0_70 = arith.constant 0 : index
      %c0_71 = arith.constant 0 : index
      %139 = vector.load %arg5[%c0_70, %c0_71] : memref<32x64xbf16, #tpu.memory_space<vmem>>, vector<32x64xbf16>
      %cst_72 = arith.constant dense<0.000000e+00> : vector<8x64xf32>
      %140 = tpu.matmul %138, %139, %cst_72 {dimension_numbers = #tpu.dot_dimension_numbers<[1], [0], [0], [1], [0, 0, 1, 1], [], []>} : vector<8x32xbf16>, vector<32x64xbf16>, vector<8x64xf32> -> vector<8x64xf32>
      %141 = vector.extract_strided_slice %140 {offsets = [0, 0], sizes = [8, 8], strides = [1, 1]} : vector<8x64xf32> to vector<8x8xf32>
      %142 = arith.truncf %141 : vector<8x8xf32> to vector<8x8xbf16>
      %c0_73 = arith.constant 0 : index
      %c0_74 = arith.constant 0 : index
      %c0_75 = arith.constant 0 : index
      %143 = vector.load %arg17[%c0_73, %c0_74, %c0_75] : memref<4x8x8xbf16, #tpu.memory_space<vmem>>, vector<1x8x8xbf16>
      %144 = vector.shape_cast %143 : vector<1x8x8xbf16> to vector<8x8xbf16>
      %145 = vector.shape_cast %142 : vector<8x8xbf16> to vector<1x8x8xbf16>
      tpu.vector_store %arg17[%c0_73, %c0_74, %c0_75], %145 {strides = array<i32>} : memref<4x8x8xbf16, #tpu.memory_space<vmem>>, vector<1x8x8xbf16>,
      %146 = vector.extract_strided_slice %140 {offsets = [0, 32], sizes = [8, 8], strides = [1, 1]} : vector<8x64xf32> to vector<8x8xf32>
      %147 = arith.truncf %146 : vector<8x8xf32> to vector<8x8xbf16>
      %c0_76 = arith.constant 0 : index
      %c0_77 = arith.constant 0 : index
      %c0_78 = arith.constant 0 : index
      %148 = vector.load %arg18[%c0_76, %c0_77, %c0_78] : memref<4x8x8xbf16, #tpu.memory_space<vmem>>, vector<1x8x8xbf16>
      %149 = vector.shape_cast %148 : vector<1x8x8xbf16> to vector<8x8xbf16>
      %150 = vector.shape_cast %147 : vector<8x8xbf16> to vector<1x8x8xbf16>
      tpu.vector_store %arg18[%c0_76, %c0_77, %c0_78], %150 {strides = array<i32>} : memref<4x8x8xbf16, #tpu.memory_space<vmem>>, vector<1x8x8xbf16>,
      %151 = vector.extract_strided_slice %140 {offsets = [0, 8], sizes = [8, 8], strides = [1, 1]} : vector<8x64xf32> to vector<8x8xf32>
      %152 = arith.truncf %151 : vector<8x8xf32> to vector<8x8xbf16>
      %c1_79 = arith.constant 1 : index
      %c0_80 = arith.constant 0 : index
      %c0_81 = arith.constant 0 : index
      %153 = vector.load %arg17[%c1_79, %c0_80, %c0_81] : memref<4x8x8xbf16, #tpu.memory_space<vmem>>, vector<1x8x8xbf16>
      %154 = vector.shape_cast %153 : vector<1x8x8xbf16> to vector<8x8xbf16>
      %155 = vector.shape_cast %152 : vector<8x8xbf16> to vector<1x8x8xbf16>
      tpu.vector_store %arg17[%c1_79, %c0_80, %c0_81], %155 {strides = array<i32>} : memref<4x8x8xbf16, #tpu.memory_space<vmem>>, vector<1x8x8xbf16>,
      %156 = vector.extract_strided_slice %140 {offsets = [0, 40], sizes = [8, 8], strides = [1, 1]} : vector<8x64xf32> to vector<8x8xf32>
      %157 = arith.truncf %156 : vector<8x8xf32> to vector<8x8xbf16>
      %c1_82 = arith.constant 1 : index
      %c0_83 = arith.constant 0 : index
      %c0_84 = arith.constant 0 : index
      %158 = vector.load %arg18[%c1_82, %c0_83, %c0_84] : memref<4x8x8xbf16, #tpu.memory_space<vmem>>, vector<1x8x8xbf16>
      %159 = vector.shape_cast %158 : vector<1x8x8xbf16> to vector<8x8xbf16>
      %160 = vector.shape_cast %157 : vector<8x8xbf16> to vector<1x8x8xbf16>
      tpu.vector_store %arg18[%c1_82, %c0_83, %c0_84], %160 {strides = array<i32>} : memref<4x8x8xbf16, #tpu.memory_space<vmem>>, vector<1x8x8xbf16>,
      %161 = vector.extract_strided_slice %140 {offsets = [0, 16], sizes = [8, 8], strides = [1, 1]} : vector<8x64xf32> to vector<8x8xf32>
      %162 = arith.truncf %161 : vector<8x8xf32> to vector<8x8xbf16>
      %c2_85 = arith.constant 2 : index
      %c0_86 = arith.constant 0 : index
      %c0_87 = arith.constant 0 : index
      %163 = vector.load %arg17[%c2_85, %c0_86, %c0_87] : memref<4x8x8xbf16, #tpu.memory_space<vmem>>, vector<1x8x8xbf16>
      %164 = vector.shape_cast %163 : vector<1x8x8xbf16> to vector<8x8xbf16>
      %165 = vector.shape_cast %162 : vector<8x8xbf16> to vector<1x8x8xbf16>
      tpu.vector_store %arg17[%c2_85, %c0_86, %c0_87], %165 {strides = array<i32>} : memref<4x8x8xbf16, #tpu.memory_space<vmem>>, vector<1x8x8xbf16>,
      %166 = vector.extract_strided_slice %140 {offsets = [0, 48], sizes = [8, 8], strides = [1, 1]} : vector<8x64xf32> to vector<8x8xf32>
      %167 = arith.truncf %166 : vector<8x8xf32> to vector<8x8xbf16>
      %c2_88 = arith.constant 2 : index
      %c0_89 = arith.constant 0 : index
      %c0_90 = arith.constant 0 : index
      %168 = vector.load %arg18[%c2_88, %c0_89, %c0_90] : memref<4x8x8xbf16, #tpu.memory_space<vmem>>, vector<1x8x8xbf16>
      %169 = vector.shape_cast %168 : vector<1x8x8xbf16> to vector<8x8xbf16>
      %170 = vector.shape_cast %167 : vector<8x8xbf16> to vector<1x8x8xbf16>
      tpu.vector_store %arg18[%c2_88, %c0_89, %c0_90], %170 {strides = array<i32>} : memref<4x8x8xbf16, #tpu.memory_space<vmem>>, vector<1x8x8xbf16>,
      %171 = vector.extract_strided_slice %140 {offsets = [0, 24], sizes = [8, 8], strides = [1, 1]} : vector<8x64xf32> to vector<8x8xf32>
      %172 = arith.truncf %171 : vector<8x8xf32> to vector<8x8xbf16>
      %c3_91 = arith.constant 3 : index
      %c0_92 = arith.constant 0 : index
      %c0_93 = arith.constant 0 : index
      %173 = vector.load %arg17[%c3_91, %c0_92, %c0_93] : memref<4x8x8xbf16, #tpu.memory_space<vmem>>, vector<1x8x8xbf16>
      %174 = vector.shape_cast %173 : vector<1x8x8xbf16> to vector<8x8xbf16>
      %175 = vector.shape_cast %172 : vector<8x8xbf16> to vector<1x8x8xbf16>
      tpu.vector_store %arg17[%c3_91, %c0_92, %c0_93], %175 {strides = array<i32>} : memref<4x8x8xbf16, #tpu.memory_space<vmem>>, vector<1x8x8xbf16>,
      %176 = vector.extract_strided_slice %140 {offsets = [0, 56], sizes = [8, 8], strides = [1, 1]} : vector<8x64xf32> to vector<8x8xf32>
      %177 = arith.truncf %176 : vector<8x8xf32> to vector<8x8xbf16>
      %c3_94 = arith.constant 3 : index
      %c0_95 = arith.constant 0 : index
      %c0_96 = arith.constant 0 : index
      %178 = vector.load %arg18[%c3_94, %c0_95, %c0_96] : memref<4x8x8xbf16, #tpu.memory_space<vmem>>, vector<1x8x8xbf16>
      %179 = vector.shape_cast %178 : vector<1x8x8xbf16> to vector<8x8xbf16>
      %180 = vector.shape_cast %177 : vector<8x8xbf16> to vector<1x8x8xbf16>
      tpu.vector_store %arg18[%c3_94, %c0_95, %c0_96], %180 {strides = array<i32>} : memref<4x8x8xbf16, #tpu.memory_space<vmem>>, vector<1x8x8xbf16>,
    } else {
    }
    %c0 = arith.constant 0 : index
    %c0_1 = arith.constant 0 : index
    %c0_2 = arith.constant 0 : index
    %3 = vector.load %arg2[%c0, %c0_1, %c0_2] : memref<1x8x32xf32, #tpu.memory_space<vmem>>, vector<1x8x32xf32>
    %4 = vector.shape_cast %3 : vector<1x8x32xf32> to vector<8x32xf32>
    %c0_3 = arith.constant 0 : index
    %c0_4 = arith.constant 0 : index
    %5 = vector.load %arg11[%c0_3, %c0_4] : memref<1x32xf32, #tpu.memory_space<vmem>>, vector<1x32xf32>
    %c0_5 = arith.constant 0 : index
    %c0_6 = arith.constant 0 : index
    %6 = vector.load %arg12[%c0_5, %c0_6] : memref<1x32xf32, #tpu.memory_space<vmem>>, vector<1x32xf32>
    %cst = arith.constant dense<0.000000e+00> : vector<8xf32>
    %7 = vector.multi_reduction <add>, %4, %cst [1] : vector<8x32xf32> to vector<8xf32>
    %8 = vector.shape_cast %7 : vector<8xf32> to vector<8x1xf32>
    %cst_7 = arith.constant 3.200000e+01 : f32
    %9 = vector.broadcast %cst_7 : f32 to vector<8x1xf32>
    %10 = arith.divf %8, %9 : vector<8x1xf32>
    %11 = vector.broadcast %10 : vector<8x1xf32> to vector<8x32xf32>
    %12 = arith.subf %4, %11 : vector<8x32xf32>
    %13 = arith.mulf %12, %12 : vector<8x32xf32>
    %cst_8 = arith.constant dense<0.000000e+00> : vector<8xf32>
    %14 = vector.multi_reduction <add>, %13, %cst_8 [1] : vector<8x32xf32> to vector<8xf32>
    %15 = vector.shape_cast %14 : vector<8xf32> to vector<8x1xf32>
    %cst_9 = arith.constant 0.0322580636 : f32
    %16 = vector.broadcast %cst_9 : f32 to vector<8x1xf32>
    %17 = arith.mulf %15, %16 : vector<8x1xf32>
    %cst_10 = arith.constant 9.99999974E-6 : f32
    %18 = vector.broadcast %cst_10 : f32 to vector<8x1xf32>
    %19 = arith.addf %17, %18 : vector<8x1xf32>
    %20 = math.rsqrt %19 : vector<8x1xf32>
    %21 = vector.broadcast %20 : vector<8x1xf32> to vector<8x32xf32>
    %22 = arith.mulf %12, %21 : vector<8x32xf32>
    %23 = vector.broadcast %5 : vector<1x32xf32> to vector<8x32xf32>
    %24 = arith.mulf %22, %23 : vector<8x32xf32>
    %25 = vector.broadcast %6 : vector<1x32xf32> to vector<8x32xf32>
    %26 = arith.addf %24, %25 : vector<8x32xf32>
    %27 = arith.truncf %26 : vector<8x32xf32> to vector<8x32xbf16>
    %c0_11 = arith.constant 0 : index
    %c0_12 = arith.constant 0 : index
    %28 = vector.load %arg4[%c0_11, %c0_12] : memref<32x32xbf16, #tpu.memory_space<vmem>>, vector<32x32xbf16>
    %cst_13 = arith.constant dense<0.000000e+00> : vector<8x32xf32>
    %29 = tpu.matmul %27, %28, %cst_13 {dimension_numbers = #tpu.dot_dimension_numbers<[1], [0], [0], [1], [0, 0, 1, 1], [], []>} : vector<8x32xbf16>, vector<32x32xbf16>, vector<8x32xf32> -> vector<8x32xf32>
    %cst_14 = arith.constant 0.353553385 : f32
    %30 = vector.broadcast %cst_14 : f32 to vector<8x32xf32>
    %31 = arith.mulf %29, %30 : vector<8x32xf32>
    %32 = vector.extract_strided_slice %31 {offsets = [0, 0], sizes = [8, 8], strides = [1, 1]} : vector<8x32xf32> to vector<8x8xf32>
    %33 = arith.truncf %32 : vector<8x8xf32> to vector<8x8xbf16>
    %c0_15 = arith.constant 0 : index
    %c0_16 = arith.constant 0 : index
    %c0_17 = arith.constant 0 : index
    %34 = vector.load %arg16[%c0_15, %c0_16, %c0_17] : memref<4x8x8xbf16, #tpu.memory_space<vmem>>, vector<1x8x8xbf16>
    %35 = vector.shape_cast %34 : vector<1x8x8xbf16> to vector<8x8xbf16>
    %36 = vector.shape_cast %33 : vector<8x8xbf16> to vector<1x8x8xbf16>
    tpu.vector_store %arg16[%c0_15, %c0_16, %c0_17], %36 {strides = array<i32>} : memref<4x8x8xbf16, #tpu.memory_space<vmem>>, vector<1x8x8xbf16>,
    %37 = vector.extract_strided_slice %31 {offsets = [0, 8], sizes = [8, 8], strides = [1, 1]} : vector<8x32xf32> to vector<8x8xf32>
    %38 = arith.truncf %37 : vector<8x8xf32> to vector<8x8xbf16>
    %c1 = arith.constant 1 : index
    %c0_18 = arith.constant 0 : index
    %c0_19 = arith.constant 0 : index
    %39 = vector.load %arg16[%c1, %c0_18, %c0_19] : memref<4x8x8xbf16, #tpu.memory_space<vmem>>, vector<1x8x8xbf16>
    %40 = vector.shape_cast %39 : vector<1x8x8xbf16> to vector<8x8xbf16>
    %41 = vector.shape_cast %38 : vector<8x8xbf16> to vector<1x8x8xbf16>
    tpu.vector_store %arg16[%c1, %c0_18, %c0_19], %41 {strides = array<i32>} : memref<4x8x8xbf16, #tpu.memory_space<vmem>>, vector<1x8x8xbf16>,
    %42 = vector.extract_strided_slice %31 {offsets = [0, 16], sizes = [8, 8], strides = [1, 1]} : vector<8x32xf32> to vector<8x8xf32>
    %43 = arith.truncf %42 : vector<8x8xf32> to vector<8x8xbf16>
    %c2 = arith.constant 2 : index
    %c0_20 = arith.constant 0 : index
    %c0_21 = arith.constant 0 : index
    %44 = vector.load %arg16[%c2, %c0_20, %c0_21] : memref<4x8x8xbf16, #tpu.memory_space<vmem>>, vector<1x8x8xbf16>
    %45 = vector.shape_cast %44 : vector<1x8x8xbf16> to vector<8x8xbf16>
    %46 = vector.shape_cast %43 : vector<8x8xbf16> to vector<1x8x8xbf16>
    tpu.vector_store %arg16[%c2, %c0_20, %c0_21], %46 {strides = array<i32>} : memref<4x8x8xbf16, #tpu.memory_space<vmem>>, vector<1x8x8xbf16>,
    %47 = vector.extract_strided_slice %31 {offsets = [0, 24], sizes = [8, 8], strides = [1, 1]} : vector<8x32xf32> to vector<8x8xf32>
    %48 = arith.truncf %47 : vector<8x8xf32> to vector<8x8xbf16>
    %c3 = arith.constant 3 : index
    %c0_22 = arith.constant 0 : index
    %c0_23 = arith.constant 0 : index
    %49 = vector.load %arg16[%c3, %c0_22, %c0_23] : memref<4x8x8xbf16, #tpu.memory_space<vmem>>, vector<1x8x8xbf16>
    %50 = vector.shape_cast %49 : vector<1x8x8xbf16> to vector<8x8xbf16>
    %51 = vector.shape_cast %48 : vector<8x8xbf16> to vector<1x8x8xbf16>
    tpu.vector_store %arg16[%c3, %c0_22, %c0_23], %51 {strides = array<i32>} : memref<4x8x8xbf16, #tpu.memory_space<vmem>>, vector<1x8x8xbf16>,
    %c8_i32 = arith.constant 8 : i32
    %52 = arith.muli %arg1, %c8_i32 : i32
    %53 = tpu.iota {dimensions = array<i32: 0>} : vector<8x8xi32>
    %54 = vector.broadcast %52 : i32 to vector<8x8xi32>
    %55 = arith.addi %53, %54 : vector<8x8xi32>
    %56 = tpu.iota {dimensions = array<i32: 1>} : vector<8x8xi32>
    %57 = arith.cmpi sgt, %56, %55 : vector<8x8xi32>
    %cst_24 = arith.constant 0.000000e+00 : f32
    %58 = vector.broadcast %cst_24 : f32 to vector<8x32xf32>
    %c0_25 = arith.constant 0 : index
    %c0_26 = arith.constant 0 : index
    %59 = vector.load %arg19[%c0_25, %c0_26] : memref<8x32xf32, #tpu.memory_space<vmem>>, vector<8x32xf32>
    tpu.vector_store %arg19[%c0_25, %c0_26], %58 {strides = array<i32>} : memref<8x32xf32, #tpu.memory_space<vmem>>, vector<8x32xf32>,
    %cst_27 = arith.constant -1.000000e+30 : f32
    %c0_i32_28 = arith.constant 0 : i32
    %c4_i32 = arith.constant 4 : i32
    %60 = arith.addi %c0_i32_28, %c4_i32 : i32
    %c1_i32 = arith.constant 1 : i32
    scf.for %arg20 = %c0_i32_28 to %60 step %c1_i32  : i32 {
      %114 = arith.index_cast %arg20 : i32 to index
      %c0_58 = arith.constant 0 : index
      %c0_59 = arith.constant 0 : index
      %115 = vector.load %arg16[%114, %c0_58, %c0_59] : memref<4x8x8xbf16, #tpu.memory_space<vmem>>, vector<1x8x8xbf16>
      %116 = vector.shape_cast %115 : vector<1x8x8xbf16> to vector<8x8xbf16>
      %117 = arith.index_cast %arg20 : i32 to index
      %c0_60 = arith.constant 0 : index
      %c0_61 = arith.constant 0 : index
      %118 = vector.load %arg17[%117, %c0_60, %c0_61] : memref<4x8x8xbf16, #tpu.memory_space<vmem>>, vector<1x8x8xbf16>
      %119 = vector.shape_cast %118 : vector<1x8x8xbf16> to vector<8x8xbf16>
      %120 = arith.index_cast %arg20 : i32 to index
      %c0_62 = arith.constant 0 : index
      %c0_63 = arith.constant 0 : index
      %121 = vector.load %arg18[%120, %c0_62, %c0_63] : memref<4x8x8xbf16, #tpu.memory_space<vmem>>, vector<1x8x8xbf16>
      %122 = vector.shape_cast %121 : vector<1x8x8xbf16> to vector<8x8xbf16>
      %cst_64 = arith.constant dense<0.000000e+00> : vector<8x8xf32>
      %123 = tpu.matmul %116, %119, %cst_64 {dimension_numbers = #tpu.dot_dimension_numbers<[1], [1], [0], [0], [0, 0, 1, 0], [], []>} : vector<8x8xbf16>, vector<8x8xbf16>, vector<8x8xf32> -> vector<8x8xf32>
      %124 = vector.broadcast %cst_27 : f32 to vector<8x8xf32>
      %125 = arith.select %57, %124, %123 : vector<8x8xi1>, vector<8x8xf32>
      %cst_65 = arith.constant dense<0xFF800000> : vector<8xf32>
      %126 = vector.multi_reduction <maximumf>, %125, %cst_65 [1] : vector<8x8xf32> to vector<8xf32>
      %127 = vector.shape_cast %126 : vector<8xf32> to vector<8x1xf32>
      %128 = vector.broadcast %127 : vector<8x1xf32> to vector<8x8xf32>
      %129 = arith.subf %125, %128 : vector<8x8xf32>
      %130 = math.exp %129 : vector<8x8xf32>
      %cst_66 = arith.constant dense<0.000000e+00> : vector<8xf32>
      %131 = vector.multi_reduction <add>, %130, %cst_66 [1] : vector<8x8xf32> to vector<8xf32>
      %132 = vector.shape_cast %131 : vector<8xf32> to vector<8x1xf32>
      %133 = arith.truncf %130 : vector<8x8xf32> to vector<8x8xbf16>
      %cst_67 = arith.constant dense<0.000000e+00> : vector<8x8xf32>
      %134 = tpu.matmul %133, %122, %cst_67 {dimension_numbers = #tpu.dot_dimension_numbers<[1], [0], [0], [1], [0, 0, 1, 1], [], []>} : vector<8x8xbf16>, vector<8x8xbf16>, vector<8x8xf32> -> vector<8x8xf32>
      %135 = tpu.reciprocal %132 {approx = true} : vector<8x1xf32> -> vector<8x1xf32>
      %136 = vector.broadcast %135 : vector<8x1xf32> to vector<8x8xf32>
      %137 = arith.mulf %134, %136 : vector<8x8xf32>
      %c0_68 = arith.constant 0 : index
      %c0_69 = arith.constant 0 : index
      %138 = vector.load %arg19[%c0_68, %c0_69] : memref<8x32xf32, #tpu.memory_space<vmem>>, vector<8x32xf32>
      %139 = arith.truncf %137 : vector<8x8xf32> to vector<8x8xbf16>
      %140 = arith.index_cast %arg20 : i32 to index
      %c0_70 = arith.constant 0 : index
      %c0_71 = arith.constant 0 : index
      %141 = vector.load %arg6[%140, %c0_70, %c0_71] : memref<4x8x32xbf16, #tpu.memory_space<vmem>>, vector<1x8x32xbf16>
      %142 = vector.shape_cast %141 : vector<1x8x32xbf16> to vector<8x32xbf16>
      %cst_72 = arith.constant dense<0.000000e+00> : vector<8x32xf32>
      %143 = tpu.matmul %139, %142, %cst_72 {dimension_numbers = #tpu.dot_dimension_numbers<[1], [0], [0], [1], [0, 0, 1, 1], [], []>} : vector<8x8xbf16>, vector<8x32xbf16>, vector<8x32xf32> -> vector<8x32xf32>
      %144 = arith.addf %138, %143 : vector<8x32xf32>
      %c0_73 = arith.constant 0 : index
      %c0_74 = arith.constant 0 : index
      %145 = vector.load %arg19[%c0_73, %c0_74] : memref<8x32xf32, #tpu.memory_space<vmem>>, vector<8x32xf32>
      tpu.vector_store %arg19[%c0_73, %c0_74], %144 {strides = array<i32>} : memref<8x32xf32, #tpu.memory_space<vmem>>, vector<8x32xf32>,
    }
    %c4_i32_29 = arith.constant 4 : i32
    %c0_30 = arith.constant 0 : index
    %c0_31 = arith.constant 0 : index
    %61 = vector.load %arg19[%c0_30, %c0_31] : memref<8x32xf32, #tpu.memory_space<vmem>>, vector<8x32xf32>
    %62 = arith.addf %4, %61 : vector<8x32xf32>
    %c0_32 = arith.constant 0 : index
    %c0_33 = arith.constant 0 : index
    %63 = vector.load %arg13[%c0_32, %c0_33] : memref<1x32xf32, #tpu.memory_space<vmem>>, vector<1x32xf32>
    %c0_34 = arith.constant 0 : index
    %c0_35 = arith.constant 0 : index
    %64 = vector.load %arg14[%c0_34, %c0_35] : memref<1x32xf32, #tpu.memory_space<vmem>>, vector<1x32xf32>
    %cst_36 = arith.constant dense<0.000000e+00> : vector<8xf32>
    %65 = vector.multi_reduction <add>, %62, %cst_36 [1] : vector<8x32xf32> to vector<8xf32>
    %66 = vector.shape_cast %65 : vector<8xf32> to vector<8x1xf32>
    %cst_37 = arith.constant 3.200000e+01 : f32
    %67 = vector.broadcast %cst_37 : f32 to vector<8x1xf32>
    %68 = arith.divf %66, %67 : vector<8x1xf32>
    %69 = vector.broadcast %68 : vector<8x1xf32> to vector<8x32xf32>
    %70 = arith.subf %62, %69 : vector<8x32xf32>
    %71 = arith.mulf %70, %70 : vector<8x32xf32>
    %cst_38 = arith.constant dense<0.000000e+00> : vector<8xf32>
    %72 = vector.multi_reduction <add>, %71, %cst_38 [1] : vector<8x32xf32> to vector<8xf32>
    %73 = vector.shape_cast %72 : vector<8xf32> to vector<8x1xf32>
    %cst_39 = arith.constant 0.0322580636 : f32
    %74 = vector.broadcast %cst_39 : f32 to vector<8x1xf32>
    %75 = arith.mulf %73, %74 : vector<8x1xf32>
    %cst_40 = arith.constant 9.99999974E-6 : f32
    %76 = vector.broadcast %cst_40 : f32 to vector<8x1xf32>
    %77 = arith.addf %75, %76 : vector<8x1xf32>
    %78 = math.rsqrt %77 : vector<8x1xf32>
    %79 = vector.broadcast %78 : vector<8x1xf32> to vector<8x32xf32>
    %80 = arith.mulf %70, %79 : vector<8x32xf32>
    %81 = vector.broadcast %63 : vector<1x32xf32> to vector<8x32xf32>
    %82 = arith.mulf %80, %81 : vector<8x32xf32>
    %83 = vector.broadcast %64 : vector<1x32xf32> to vector<8x32xf32>
    %84 = arith.addf %82, %83 : vector<8x32xf32>
    %85 = arith.truncf %84 : vector<8x32xf32> to vector<8x32xbf16>
    %c0_41 = arith.constant 0 : index
    %c0_42 = arith.constant 0 : index
    %86 = vector.load %arg7[%c0_41, %c0_42] : memref<32x128xbf16, #tpu.memory_space<vmem>>, vector<32x128xbf16>
    %cst_43 = arith.constant dense<0.000000e+00> : vector<8x128xf32>
    %87 = tpu.matmul %85, %86, %cst_43 {dimension_numbers = #tpu.dot_dimension_numbers<[1], [0], [0], [1], [0, 0, 1, 1], [], []>} : vector<8x32xbf16>, vector<32x128xbf16>, vector<8x128xf32> -> vector<8x128xf32>
    %c0_44 = arith.constant 0 : index
    %c0_45 = arith.constant 0 : index
    %88 = vector.load %arg8[%c0_44, %c0_45] : memref<1x128xf32, #tpu.memory_space<vmem>>, vector<1x128xf32>
    %89 = vector.broadcast %88 : vector<1x128xf32> to vector<8x128xf32>
    %90 = arith.addf %87, %89 : vector<8x128xf32>
    %cst_46 = arith.constant 5.000000e-01 : f32
    %91 = vector.broadcast %cst_46 : f32 to vector<8x128xf32>
    %92 = arith.mulf %91, %90 : vector<8x128xf32>
    %cst_47 = arith.constant 4.471500e-02 : f32
    %93 = vector.broadcast %cst_47 : f32 to vector<8x128xf32>
    %94 = arith.mulf %93, %90 : vector<8x128xf32>
    %95 = arith.mulf %94, %90 : vector<8x128xf32>
    %96 = arith.mulf %95, %90 : vector<8x128xf32>
    %97 = arith.addf %90, %96 : vector<8x128xf32>
    %cst_48 = arith.constant 0.797884583 : f32
    %98 = vector.broadcast %cst_48 : f32 to vector<8x128xf32>
    %99 = arith.mulf %98, %97 : vector<8x128xf32>
    %100 = math.tanh %99 : vector<8x128xf32>
    %cst_49 = arith.constant 1.000000e+00 : f32
    %101 = vector.broadcast %cst_49 : f32 to vector<8x128xf32>
    %102 = arith.addf %101, %100 : vector<8x128xf32>
    %103 = arith.mulf %92, %102 : vector<8x128xf32>
    %104 = arith.truncf %103 : vector<8x128xf32> to vector<8x128xbf16>
    %c0_50 = arith.constant 0 : index
    %c0_51 = arith.constant 0 : index
    %105 = vector.load %arg9[%c0_50, %c0_51] : memref<128x32xbf16, #tpu.memory_space<vmem>>, vector<128x32xbf16>
    %cst_52 = arith.constant dense<0.000000e+00> : vector<8x32xf32>
    %106 = tpu.matmul %104, %105, %cst_52 {dimension_numbers = #tpu.dot_dimension_numbers<[1], [0], [0], [1], [0, 0, 1, 1], [], []>} : vector<8x128xbf16>, vector<128x32xbf16>, vector<8x32xf32> -> vector<8x32xf32>
    %c0_53 = arith.constant 0 : index
    %c0_54 = arith.constant 0 : index
    %107 = vector.load %arg10[%c0_53, %c0_54] : memref<1x32xf32, #tpu.memory_space<vmem>>, vector<1x32xf32>
    %108 = vector.broadcast %107 : vector<1x32xf32> to vector<8x32xf32>
    %109 = arith.addf %106, %108 : vector<8x32xf32>
    %110 = arith.addf %62, %109 : vector<8x32xf32>
    %c0_55 = arith.constant 0 : index
    %c0_56 = arith.constant 0 : index
    %c0_57 = arith.constant 0 : index
    %111 = vector.load %arg15[%c0_55, %c0_56, %c0_57] : memref<1x8x32xf32, #tpu.memory_space<vmem>>, vector<1x8x32xf32>
    %112 = vector.shape_cast %111 : vector<1x8x32xf32> to vector<8x32xf32>
    %113 = vector.shape_cast %110 : vector<8x32xf32> to vector<1x8x32xf32>
    tpu.vector_store %arg15[%c0_55, %c0_56, %c0_57], %113 {strides = array<i32>} : memref<1x8x32xf32, #tpu.memory_space<vmem>>, vector<1x8x32xf32>,
    return
  }
  func.func @transform_0(%arg0: i32, %arg1: i32) -> (i32, i32, i32) {
    %c0_i32 = arith.constant 0 : i32
    %c0_i32_0 = arith.constant 0 : i32
    return %arg0, %arg1, %c0_i32 : i32, i32, i32
  }
  func.func @transform_1(%arg0: i32, %arg1: i32) -> (i32, i32, i32) {
    %c0_i32 = arith.constant 0 : i32
    %c0_i32_0 = arith.constant 0 : i32
    %c0_i32_1 = arith.constant 0 : i32
    return %arg0, %c0_i32, %c0_i32_0 : i32, i32, i32
  }
  func.func @transform_2(%arg0: i32, %arg1: i32) -> (i32, i32) {
    %c0_i32 = arith.constant 0 : i32
    %c0_i32_0 = arith.constant 0 : i32
    %c0_i32_1 = arith.constant 0 : i32
    return %c0_i32, %c0_i32_0 : i32, i32
  }
  func.func @transform_3(%arg0: i32, %arg1: i32) -> (i32, i32) {
    %c0_i32 = arith.constant 0 : i32
    %c0_i32_0 = arith.constant 0 : i32
    %c0_i32_1 = arith.constant 0 : i32
    return %c0_i32, %c0_i32_0 : i32, i32
  }
  func.func @transform_4(%arg0: i32, %arg1: i32) -> (i32, i32, i32) {
    %c0_i32 = arith.constant 0 : i32
    %c0_i32_0 = arith.constant 0 : i32
    %c0_i32_1 = arith.constant 0 : i32
    %c0_i32_2 = arith.constant 0 : i32
    return %c0_i32, %c0_i32_0, %c0_i32_1 : i32, i32, i32
  }
  func.func @transform_5(%arg0: i32, %arg1: i32) -> (i32, i32) {
    %c0_i32 = arith.constant 0 : i32
    %c0_i32_0 = arith.constant 0 : i32
    %c0_i32_1 = arith.constant 0 : i32
    return %c0_i32, %c0_i32_0 : i32, i32
  }
  func.func @transform_6(%arg0: i32, %arg1: i32) -> (i32, i32) {
    %c0_i32 = arith.constant 0 : i32
    %c0_i32_0 = arith.constant 0 : i32
    %c0_i32_1 = arith.constant 0 : i32
    return %c0_i32, %c0_i32_0 : i32, i32
  }
  func.func @transform_7(%arg0: i32, %arg1: i32) -> (i32, i32) {
    %c0_i32 = arith.constant 0 : i32
    %c0_i32_0 = arith.constant 0 : i32
    %c0_i32_1 = arith.constant 0 : i32
    return %c0_i32, %c0_i32_0 : i32, i32
  }
  func.func @transform_8(%arg0: i32, %arg1: i32) -> (i32, i32) {
    %c0_i32 = arith.constant 0 : i32
    %c0_i32_0 = arith.constant 0 : i32
    %c0_i32_1 = arith.constant 0 : i32
    return %c0_i32, %c0_i32_0 : i32, i32
  }
  func.func @transform_9(%arg0: i32, %arg1: i32) -> (i32, i32) {
    %c0_i32 = arith.constant 0 : i32
    %c0_i32_0 = arith.constant 0 : i32
    %c0_i32_1 = arith.constant 0 : i32
    return %c0_i32, %c0_i32_0 : i32, i32
  }
  func.func @transform_10(%arg0: i32, %arg1: i32) -> (i32, i32) {
    %c0_i32 = arith.constant 0 : i32
    %c0_i32_0 = arith.constant 0 : i32
    %c0_i32_1 = arith.constant 0 : i32
    return %c0_i32, %c0_i32_0 : i32, i32
  }
  func.func @transform_11(%arg0: i32, %arg1: i32) -> (i32, i32) {
    %c0_i32 = arith.constant 0 : i32
    %c0_i32_0 = arith.constant 0 : i32
    %c0_i32_1 = arith.constant 0 : i32
    return %c0_i32, %c0_i32_0 : i32, i32
  }
  func.func @transform_12(%arg0: i32, %arg1: i32) -> (i32, i32) {
    %c0_i32 = arith.constant 0 : i32
    %c0_i32_0 = arith.constant 0 : i32
    %c0_i32_1 = arith.constant 0 : i32
    return %c0_i32, %c0_i32_0 : i32, i32
  }
  func.func @transform_13(%arg0: i32, %arg1: i32) -> (i32, i32, i32) {
    %c0_i32 = arith.constant 0 : i32
    %c0_i32_0 = arith.constant 0 : i32
    return %arg0, %arg1, %c0_i32 : i32, i32, i32
  }
}

</mosaic_0001>

<llo_original>
// kernel: tpu_custom_call.1
$region0: #{tpu_custom_call.1}
  #allocation0 [shape = 'u32[]', space=smem, size = 0x4, offset = 0x4, fixed_abs, tag = 'smem constant byte address 0x4 - core index']
  #allocation1 [shape = 'u32[72,128]{1,0:T(1,128)}', space=vmem, size = 0x9000, scoped, tag = 'internal scratch']
  #allocation2 [shape = 'bf16[4,8,8]{2,1,0:T(8,128)(2,1)}', space=vmem, size = 0x2000, scoped, tag = 'scratch operand']
  #allocation3 [shape = 'bf16[4,8,8]{2,1,0:T(8,128)(2,1)}', space=vmem, size = 0x2000, scoped, tag = 'scratch operand']
  #allocation4 [shape = 'bf16[4,8,8]{2,1,0:T(8,128)(2,1)}', space=vmem, size = 0x2000, scoped, tag = 'scratch operand']
  #allocation5 [shape = 'f32[8,32]{1,0:T(8,128)}', space=vmem, size = 0x1000, scoped, tag = 'scratch operand']
  %s0 = inlined_call_operand.vmem [shape: f32[2,8,32], index: 0, kind: input, shape index: {}]
  %s1 = inlined_call_operand.vmem [shape: f32[2,8,32], index: 1, kind: input, shape index: {}]
  %s2 = inlined_call_operand.vmem [shape: bf16[32,32], index: 2, kind: input, shape index: {}]
  %s3 = inlined_call_operand.vmem [shape: bf16[32,64], index: 3, kind: input, shape index: {}]
  %s4 = inlined_call_operand.vmem [shape: bf16[4,8,32], index: 4, kind: input, shape index: {}]
  %s5 = inlined_call_operand.hbm [shape: bf16[32,128], index: 5, kind: input, shape index: {}]
  %s6 = inlined_call_operand.vmem [shape: f32[1,128], index: 6, kind: input, shape index: {}]
  %s7 = inlined_call_operand.vmem [shape: bf16[128,32], index: 7, kind: input, shape index: {}]
  %s8 = inlined_call_operand.vmem [shape: f32[1,32], index: 8, kind: input, shape index: {}]
  %s9 = inlined_call_operand.vmem [shape: f32[1,32], index: 9, kind: input, shape index: {}]
  %s10 = inlined_call_operand.vmem [shape: f32[1,32], index: 10, kind: input, shape index: {}]
  %s11 = inlined_call_operand.vmem [shape: f32[1,32], index: 11, kind: input, shape index: {}]
  %s12 = inlined_call_operand.vmem [shape: f32[1,32], index: 12, kind: input, shape index: {}]
  %s13 = inlined_call_operand.hbm [shape: f32[2,8,32], index: 13, kind: output, shape index: {}]
  %s14 = sld [smem:[#allocation0]]
  $region100: #{tpu_custom_call.1} parent=0
    _
  %s16 = ssub.s32 1, %s14
  %s17 = scalar_select 0, %s16, %s14
  $region1: #{tpu_custom_call.1} parent=0
    #allocation6 [shape = 'u8[8192]{0}', space=vmem, size = 0x2000, scoped, tag = 'input window, operand 5, single buffered']
    #allocation7 [shape = 's32[2]{0}', space=sflag, size = 0x8, scoped, tag = 'scoped memory for tpu_custom_call.1']
    #allocation8 [shape = 's32[2]{0}', space=sflag, size = 0x8, scoped, tag = 'scoped memory for tpu_custom_call.1']
    #allocation9 [shape = 'u8[8192]{0}', space=vmem, size = 0x2000, scoped, tag = 'output window, operand 0']
    %18 = vsyncpa [#allocation7], 0
    %19 = vsyncpa [#allocation8], 0
    %s20 = scalar_lea.sflag [#allocation8], 1
    %21 = vsyncpa %s20, 0
    loop: start=0, step=1, limit=4
    $region2: #{tpu_custom_call.1} parent=1 // loop_pre_header
      _
    $region3: #{tpu_custom_call.1} parent=1 // loop_header
      %s23 = sphi 0, %s27
      %p24 = scmp.ge.s32.totalorder %s23, 4
      %s30 = sphi 0, %s42
      %s31 = sphi 0, %s38
      %s32 = sphi 0, %s30
      %s33 = sphi 0, %s31
      %s34 = sphi 0, %s32
      %s35 = sphi 0, %s33
      %s47 = sphi 0, %s49
      %s50 = sphi 0, %s47
      %s51 = sphi 0, %s50
      %s67 = sphi 0, %s51
      %s73 = sphi 0, %s75
      %s76 = sphi 0, %s73
      %s77 = sphi 0, %s76
      %s93 = sphi 0, %s77
      %s97 = sphi 0, %s97
      %s99 = sphi 0, %s97
      %s100 = sphi 0, %s99
      %s114 = sphi 0, %s100
      %s118 = sphi 0, %s118
      %s120 = sphi 0, %s118
      %s121 = sphi 0, %s120
      %s135 = sphi 0, %s121
      %s139 = sphi 0, %s139
      %s141 = sphi 0, %s139
      %s142 = sphi 0, %s141
      %s156 = sphi 0, %s142
      %s160 = sphi 0, %s160
      %s162 = sphi 0, %s160
      %s163 = sphi 0, %s162
      %s177 = sphi 0, %s163
      %s181 = sphi 0, %s181
      %s183 = sphi 0, %s181
      %s184 = sphi 0, %s183
      %s198 = sphi 0, %s184
      %s202 = sphi 0, %s202
      %s204 = sphi 0, %s202
      %s205 = sphi 0, %s204
      %s219 = sphi 0, %s205
      %s223 = sphi 0, %s223
      %s225 = sphi 0, %s223
      %s226 = sphi 0, %s225
      %s240 = sphi 0, %s226
      %s244 = sphi 0, %s244
      %s246 = sphi 0, %s244
      %s247 = sphi 0, %s246
      %s261 = sphi 0, %s247
      %s265 = sphi 0, %s265
      %s267 = sphi 0, %s265
      %s268 = sphi 0, %s267
      %s282 = sphi 0, %s268
      %s286 = sphi 0, %s286
      %s288 = sphi 0, %s286
      %s289 = sphi 0, %s288
      %s303 = sphi 0, %s289
      %s307 = sphi 0, %s307
      %s309 = sphi 0, %s307
      %s310 = sphi 0, %s309
      %s324 = sphi 0, %s310
      %s332 = sphi 0, %s334
      %s335 = sphi 0, %s332
      %s336 = sphi 0, %s335
      %s352 = sphi 0, %s336
    $region4: #{tpu_custom_call.1} parent=1 // loop_header_branch
      %26 = sbr.rel (%p24) target = $region8
    $region5: #{tpu_custom_call.1} parent=1 // loop_body
      %s28 = ssub.s32 %s23, 1
      %s29 = ssub.s32 %s23, 2
      %s36 = sadd.s32 1, %s31
      %p37 = scmp.ge.s32.totalorder %s36, 1
      %s38 = scalar_select %p37, 0, %s36
      %s39 = sadd.s32 1, %s30
      %s40 = scalar_select %p37, %s39, %s30
      %p41 = scmp.ge.s32.totalorder %s40, 2
      %s42 = scalar_select %p41, 0, %s40
      %s43 = ssub.s32 %s30, %s42
      %s44 = ssub.s32 %s31, %s38
      %s45 = sor.u32 %s43, %s44
      %p46 = scmp.eq.s32.totalorder %s45, 0
      %s48 = sadd.s32 %s47, 1
      %s49 = scalar_select %p46, %s47, %s48
      %p52 = pneg %p46
      %p53 = scmp.eq.s32.totalorder %s23, 1
      %p54 = por %p52, %p53
      %p55 = scmp.ne.s32.totalorder %s47, %s50
      %p56 = scmp.eq.s32.totalorder %s23, 0
      %p57 = por %p55, %p56
      %p58 = scmp.ne.s32.totalorder %s47, %s50
      %p59 = scmp.eq.s32.totalorder %s28, 1
      %p60 = por %p58, %p59
      %p61 = scmp.ne.s32.totalorder %s50, %s51
      %p62 = scmp.eq.s32.totalorder %s28, 0
      %p63 = por %p61, %p62
      %p64 = scmp.ne.s32.totalorder %s50, %s51
      %p65 = scmp.eq.s32.totalorder %s29, 1
      %p66 = por %p64, %p65
      %p68 = scmp.ne.s32.totalorder %s51, %s67
      %p69 = scmp.eq.s32.totalorder %s29, 0
      %p70 = por %p68, %p69
      %s71 = ssub.s32 %s30, %s42
      %p72 = scmp.eq.s32.totalorder %s71, 0
      %s74 = sadd.s32 %s73, 1
      %s75 = scalar_select %p72, %s73, %s74
      %p78 = pneg %p72
      %p79 = scmp.eq.s32.totalorder %s23, 1
      %p80 = por %p78, %p79
      %p81 = scmp.ne.s32.totalorder %s73, %s76
      %p82 = scmp.eq.s32.totalorder %s23, 0
      %p83 = por %p81, %p82
      %p84 = scmp.ne.s32.totalorder %s73, %s76
      %p85 = scmp.eq.s32.totalorder %s28, 1
      %p86 = por %p84, %p85
      %p87 = scmp.ne.s32.totalorder %s76, %s77
      %p88 = scmp.eq.s32.totalorder %s28, 0
      %p89 = por %p87, %p88
      %p90 = scmp.ne.s32.totalorder %s76, %s77
      %p91 = scmp.eq.s32.totalorder %s29, 1
      %p92 = por %p90, %p91
      %p94 = scmp.ne.s32.totalorder %s77, %s93
      %p95 = scmp.eq.s32.totalorder %s29, 0
      %p96 = por %p94, %p95
      %s98 = sadd.s32 %s97, 1
      %p101 = scmp.eq.s32.totalorder %s23, 1
      %p102 = scmp.ne.s32.totalorder %s97, %s99
      %p103 = scmp.eq.s32.totalorder %s23, 0
      %p104 = por %p102, %p103
      %p105 = scmp.ne.s32.totalorder %s97, %s99
      %p106 = scmp.eq.s32.totalorder %s28, 1
      %p107 = por %p105, %p106
      %p108 = scmp.ne.s32.totalorder %s99, %s100
      %p109 = scmp.eq.s32.totalorder %s28, 0
      %p110 = por %p108, %p109
      %p111 = scmp.ne.s32.totalorder %s99, %s100
      %p112 = scmp.eq.s32.totalorder %s29, 1
      %p113 = por %p111, %p112
      %p115 = scmp.ne.s32.totalorder %s100, %s114
      %p116 = scmp.eq.s32.totalorder %s29, 0
      %p117 = por %p115, %p116
      %s119 = sadd.s32 %s118, 1
      %p122 = scmp.eq.s32.totalorder %s23, 1
      %p123 = scmp.ne.s32.totalorder %s118, %s120
      %p124 = scmp.eq.s32.totalorder %s23, 0
      %p125 = por %p123, %p124
      %p126 = scmp.ne.s32.totalorder %s118, %s120
      %p127 = scmp.eq.s32.totalorder %s28, 1
      %p128 = por %p126, %p127
      %p129 = scmp.ne.s32.totalorder %s120, %s121
      %p130 = scmp.eq.s32.totalorder %s28, 0
      %p131 = por %p129, %p130
      %p132 = scmp.ne.s32.totalorder %s120, %s121
      %p133 = scmp.eq.s32.totalorder %s29, 1
      %p134 = por %p132, %p133
      %p136 = scmp.ne.s32.totalorder %s121, %s135
      %p137 = scmp.eq.s32.totalorder %s29, 0
      %p138 = por %p136, %p137
      %s140 = sadd.s32 %s139, 1
      %p143 = scmp.eq.s32.totalorder %s23, 1
      %p144 = scmp.ne.s32.totalorder %s139, %s141
      %p145 = scmp.eq.s32.totalorder %s23, 0
      %p146 = por %p144, %p145
      %p147 = scmp.ne.s32.totalorder %s139, %s141
      %p148 = scmp.eq.s32.totalorder %s28, 1
      %p149 = por %p147, %p148
      %p150 = scmp.ne.s32.totalorder %s141, %s142
      %p151 = scmp.eq.s32.totalorder %s28, 0
      %p152 = por %p150, %p151
      %p153 = scmp.ne.s32.totalorder %s141, %s142
      %p154 = scmp.eq.s32.totalorder %s29, 1
      %p155 = por %p153, %p154
      %p157 = scmp.ne.s32.totalorder %s142, %s156
      %p158 = scmp.eq.s32.totalorder %s29, 0
      %p159 = por %p157, %p158
      %s161 = sadd.s32 %s160, 1
      %p164 = scmp.eq.s32.totalorder %s23, 1
      %p165 = scmp.ne.s32.totalorder %s160, %s162
      %p166 = scmp.eq.s32.totalorder %s23, 0
      %p167 = por %p165, %p166
      %p168 = scmp.ne.s32.totalorder %s160, %s162
      %p169 = scmp.eq.s32.totalorder %s28, 1
      %p170 = por %p168, %p169
      %p171 = scmp.ne.s32.totalorder %s162, %s163
      %p172 = scmp.eq.s32.totalorder %s28, 0
      %p173 = por %p171, %p172
      %p174 = scmp.ne.s32.totalorder %s162, %s163
      %p175 = scmp.eq.s32.totalorder %s29, 1
      %p176 = por %p174, %p175
      %p178 = scmp.ne.s32.totalorder %s163, %s177
      %p179 = scmp.eq.s32.totalorder %s29, 0
      %p180 = por %p178, %p179
      %s182 = sadd.s32 %s181, 1
      %p185 = scmp.eq.s32.totalorder %s23, 1
      %p186 = scmp.ne.s32.totalorder %s181, %s183
      %p187 = scmp.eq.s32.totalorder %s23, 0
      %p188 = por %p186, %p187
      %p189 = scmp.ne.s32.totalorder %s181, %s183
      %p190 = scmp.eq.s32.totalorder %s28, 1
      %p191 = por %p189, %p190
      %p192 = scmp.ne.s32.totalorder %s183, %s184
      %p193 = scmp.eq.s32.totalorder %s28, 0
      %p194 = por %p192, %p193
      %p195 = scmp.ne.s32.totalorder %s183, %s184
      %p196 = scmp.eq.s32.totalorder %s29, 1
      %p197 = por %p195, %p196
      %p199 = scmp.ne.s32.totalorder %s184, %s198
      %p200 = scmp.eq.s32.totalorder %s29, 0
      %p201 = por %p199, %p200
      %s203 = sadd.s32 %s202, 1
      %p206 = scmp.eq.s32.totalorder %s23, 1
      %p207 = scmp.ne.s32.totalorder %s202, %s204
      %p208 = scmp.eq.s32.totalorder %s23, 0
      %p209 = por %p207, %p208
      %p210 = scmp.ne.s32.totalorder %s202, %s204
      %p211 = scmp.eq.s32.totalorder %s28, 1
      %p212 = por %p210, %p211
      %p213 = scmp.ne.s32.totalorder %s204, %s205
      %p214 = scmp.eq.s32.totalorder %s28, 0
      %p215 = por %p213, %p214
      %p216 = scmp.ne.s32.totalorder %s204, %s205
      %p217 = scmp.eq.s32.totalorder %s29, 1
      %p218 = por %p216, %p217
      %p220 = scmp.ne.s32.totalorder %s205, %s219
      %p221 = scmp.eq.s32.totalorder %s29, 0
      %p222 = por %p220, %p221
      %s224 = sadd.s32 %s223, 1
      %p227 = scmp.eq.s32.totalorder %s23, 1
      %p228 = scmp.ne.s32.totalorder %s223, %s225
      %p229 = scmp.eq.s32.totalorder %s23, 0
      %p230 = por %p228, %p229
      %p231 = scmp.ne.s32.totalorder %s223, %s225
      %p232 = scmp.eq.s32.totalorder %s28, 1
      %p233 = por %p231, %p232
      %p234 = scmp.ne.s32.totalorder %s225, %s226
      %p235 = scmp.eq.s32.totalorder %s28, 0
      %p236 = por %p234, %p235
      %p237 = scmp.ne.s32.totalorder %s225, %s226
      %p238 = scmp.eq.s32.totalorder %s29, 1
      %p239 = por %p237, %p238
      %p241 = scmp.ne.s32.totalorder %s226, %s240
      %p242 = scmp.eq.s32.totalorder %s29, 0
      %p243 = por %p241, %p242
      %s245 = sadd.s32 %s244, 1
      %p248 = scmp.eq.s32.totalorder %s23, 1
      %p249 = scmp.ne.s32.totalorder %s244, %s246
      %p250 = scmp.eq.s32.totalorder %s23, 0
      %p251 = por %p249, %p250
      %p252 = scmp.ne.s32.totalorder %s244, %s246
      %p253 = scmp.eq.s32.totalorder %s28, 1
      %p254 = por %p252, %p253
      %p255 = scmp.ne.s32.totalorder %s246, %s247
      %p256 = scmp.eq.s32.totalorder %s28, 0
      %p257 = por %p255, %p256
      %p258 = scmp.ne.s32.totalorder %s246, %s247
      %p259 = scmp.eq.s32.totalorder %s29, 1
      %p260 = por %p258, %p259
      %p262 = scmp.ne.s32.totalorder %s247, %s261
      %p263 = scmp.eq.s32.totalorder %s29, 0
      %p264 = por %p262, %p263
      %s266 = sadd.s32 %s265, 1
      %p269 = scmp.eq.s32.totalorder %s23, 1
      %p270 = scmp.ne.s32.totalorder %s265, %s267
      %p271 = scmp.eq.s32.totalorder %s23, 0
      %p272 = por %p270, %p271
      %p273 = scmp.ne.s32.totalorder %s265, %s267
      %p274 = scmp.eq.s32.totalorder %s28, 1
      %p275 = por %p273, %p274
      %p276 = scmp.ne.s32.totalorder %s267, %s268
      %p277 = scmp.eq.s32.totalorder %s28, 0
      %p278 = por %p276, %p277
      %p279 = scmp.ne.s32.totalorder %s267, %s268
      %p280 = scmp.eq.s32.totalorder %s29, 1
      %p281 = por %p279, %p280
      %p283 = scmp.ne.s32.totalorder %s268, %s282
      %p284 = scmp.eq.s32.totalorder %s29, 0
      %p285 = por %p283, %p284
      %s287 = sadd.s32 %s286, 1
      %p290 = scmp.eq.s32.totalorder %s23, 1
      %p291 = scmp.ne.s32.totalorder %s286, %s288
      %p292 = scmp.eq.s32.totalorder %s23, 0
      %p293 = por %p291, %p292
      %p294 = scmp.ne.s32.totalorder %s286, %s288
      %p295 = scmp.eq.s32.totalorder %s28, 1
      %p296 = por %p294, %p295
      %p297 = scmp.ne.s32.totalorder %s288, %s289
      %p298 = scmp.eq.s32.totalorder %s28, 0
      %p299 = por %p297, %p298
      %p300 = scmp.ne.s32.totalorder %s288, %s289
      %p301 = scmp.eq.s32.totalorder %s29, 1
      %p302 = por %p300, %p301
      %p304 = scmp.ne.s32.totalorder %s289, %s303
      %p305 = scmp.eq.s32.totalorder %s29, 0
      %p306 = por %p304, %p305
      %s308 = sadd.s32 %s307, 1
      %p311 = scmp.eq.s32.totalorder %s23, 1
      %p312 = scmp.ne.s32.totalorder %s307, %s309
      %p313 = scmp.eq.s32.totalorder %s23, 0
      %p314 = por %p312, %p313
      %p315 = scmp.ne.s32.totalorder %s307, %s309
      %p316 = scmp.eq.s32.totalorder %s28, 1
      %p317 = por %p315, %p316
      %p318 = scmp.ne.s32.totalorder %s309, %s310
      %p319 = scmp.eq.s32.totalorder %s28, 0
      %p320 = por %p318, %p319
      %p321 = scmp.ne.s32.totalorder %s309, %s310
      %p322 = scmp.eq.s32.totalorder %s29, 1
      %p323 = por %p321, %p322
      %p325 = scmp.ne.s32.totalorder %s310, %s324
      %p326 = scmp.eq.s32.totalorder %s29, 0
      %p327 = por %p325, %p326
      %s328 = ssub.s32 %s30, %s42
      %s329 = ssub.s32 %s31, %s38
      %s330 = sor.u32 %s328, %s329
      %p331 = scmp.eq.s32.totalorder %s330, 0
      %s333 = sadd.s32 %s332, 1
      %s334 = scalar_select %p331, %s332, %s333
      %p337 = pneg %p331
      %p338 = scmp.eq.s32.totalorder %s23, 1
      %p339 = por %p337, %p338
      %p340 = scmp.ne.s32.totalorder %s332, %s335
      %p341 = scmp.eq.s32.totalorder %s23, 0
      %p342 = por %p340, %p341
      %p343 = scmp.ne.s32.totalorder %s332, %s335
      %p344 = scmp.eq.s32.totalorder %s28, 1
      %p345 = por %p343, %p344
      %p346 = scmp.ne.s32.totalorder %s335, %s336
      %p347 = scmp.eq.s32.totalorder %s28, 0
      %p348 = por %p346, %p347
      %p349 = scmp.ne.s32.totalorder %s335, %s336
      %p350 = scmp.eq.s32.totalorder %s29, 1
      %p351 = por %p349, %p350
      %p353 = scmp.ne.s32.totalorder %s336, %s352
      %p354 = scmp.eq.s32.totalorder %s29, 0
      %p355 = por %p353, %p354
      %p356 = scmp.le.s32.totalorder 1, %s23
      %p357 = scmp.lt.s32.totalorder %s23, 3
      %p358 = pnand %p356, %p357
      %p359 = pneg %p358
      // Predicated region
      $region9: #{tpu_custom_call.1} parent=5 // pred_check
        _
      $region10: #{tpu_custom_call.1} parent=5 // pred_check_branch
        %361 = sbr.rel (%p358) target = $region12
      $region11: #{tpu_custom_call.1} parent=5 // pred_region
        %s362 = ssub.s32 %s23, 1
        // Predicated region
        $region13: #{tpu_custom_call.1} parent=11 // pred_check
          %p363 = pneg %p110
        $region14: #{tpu_custom_call.1} parent=11 // pred_check_branch
          %365 = sbr.rel (%p363) target = $region16
        $region15: #{tpu_custom_call.1} parent=11 // pred_region
          _
        $region16: #{tpu_custom_call.1} parent=11 // pred_fallthru
          _
        // Predicated region
        $region17: #{tpu_custom_call.1} parent=11 // pred_check
          %p366 = pneg %p131
        $region18: #{tpu_custom_call.1} parent=11 // pred_check_branch
          %368 = sbr.rel (%p366) target = $region20
        $region19: #{tpu_custom_call.1} parent=11 // pred_region
          _
        $region20: #{tpu_custom_call.1} parent=11 // pred_fallthru
          _
        // Predicated region
        $region21: #{tpu_custom_call.1} parent=11 // pred_check
          %p369 = pneg %p152
        $region22: #{tpu_custom_call.1} parent=11 // pred_check_branch
          %371 = sbr.rel (%p369) target = $region24
        $region23: #{tpu_custom_call.1} parent=11 // pred_region
          _
        $region24: #{tpu_custom_call.1} parent=11 // pred_fallthru
          _
        // Predicated region
        $region25: #{tpu_custom_call.1} parent=11 // pred_check
          %p372 = pneg %p173
        $region26: #{tpu_custom_call.1} parent=11 // pred_check_branch
          %374 = sbr.rel (%p372) target = $region28
        $region27: #{tpu_custom_call.1} parent=11 // pred_region
          %376 = vsyncadd [#allocation7], 0
          %s377 = sshll.u32 %s5, 4
          %s378 = int_to_ptr.hbm [resolvable:$true] %s377
          %s379 = sshll.u32 [#allocation6], 4
          %s380 = int_to_ptr.vmem [resolvable:$true] %s379
          %385 = dma.hbm_to_vmem [thread:$0]  %s378, 256, %s380, [#allocation7], 64, 64, 4
        $region28: #{tpu_custom_call.1} parent=11 // pred_fallthru
          _
        // Predicated region
        $region29: #{tpu_custom_call.1} parent=11 // pred_check
          %p386 = pneg %p194
        $region30: #{tpu_custom_call.1} parent=11 // pred_check_branch
          %388 = sbr.rel (%p386) target = $region32
        $region31: #{tpu_custom_call.1} parent=11 // pred_region
          _
        $region32: #{tpu_custom_call.1} parent=11 // pred_fallthru
          _
        // Predicated region
        $region33: #{tpu_custom_call.1} parent=11 // pred_check
          %p389 = pneg %p215
        $region34: #{tpu_custom_call.1} parent=11 // pred_check_branch
          %391 = sbr.rel (%p389) target = $region36
        $region35: #{tpu_custom_call.1} parent=11 // pred_region
          _
        $region36: #{tpu_custom_call.1} parent=11 // pred_fallthru
          _
        // Predicated region
        $region37: #{tpu_custom_call.1} parent=11 // pred_check
          %p392 = pneg %p236
        $region38: #{tpu_custom_call.1} parent=11 // pred_check_branch
          %394 = sbr.rel (%p392) target = $region40
        $region39: #{tpu_custom_call.1} parent=11 // pred_region
          _
        $region40: #{tpu_custom_call.1} parent=11 // pred_fallthru
          _
        // Predicated region
        $region41: #{tpu_custom_call.1} parent=11 // pred_check
          %p395 = pneg %p257
        $region42: #{tpu_custom_call.1} parent=11 // pred_check_branch
          %397 = sbr.rel (%p395) target = $region44
        $region43: #{tpu_custom_call.1} parent=11 // pred_region
          _
        $region44: #{tpu_custom_call.1} parent=11 // pred_fallthru
          _
        // Predicated region
        $region45: #{tpu_custom_call.1} parent=11 // pred_check
          %p398 = pneg %p278
        $region46: #{tpu_custom_call.1} parent=11 // pred_check_branch
          %400 = sbr.rel (%p398) target = $region48
        $region47: #{tpu_custom_call.1} parent=11 // pred_region
          _
        $region48: #{tpu_custom_call.1} parent=11 // pred_fallthru
          _
        // Predicated region
        $region49: #{tpu_custom_call.1} parent=11 // pred_check
          %p401 = pneg %p299
        $region50: #{tpu_custom_call.1} parent=11 // pred_check_branch
          %403 = sbr.rel (%p401) target = $region52
        $region51: #{tpu_custom_call.1} parent=11 // pred_region
          _
        $region52: #{tpu_custom_call.1} parent=11 // pred_fallthru
          _
        // Predicated region
        $region53: #{tpu_custom_call.1} parent=11 // pred_check
          %p404 = pneg %p320
        $region54: #{tpu_custom_call.1} parent=11 // pred_check_branch
          %406 = sbr.rel (%p404) target = $region56
        $region55: #{tpu_custom_call.1} parent=11 // pred_region
          _
        $region56: #{tpu_custom_call.1} parent=11 // pred_fallthru
          _
      $region12: #{tpu_custom_call.1} parent=5 // pred_fallthru
        _
      %p407 = scmp.lt.s32.totalorder %s23, 2
      // Predicated region
      $region57: #{tpu_custom_call.1} parent=5 // pred_check
        %p408 = pneg %p407
      $region58: #{tpu_custom_call.1} parent=5 // pred_check_branch
        %410 = sbr.rel (%p408) target = $region60
      $region59: #{tpu_custom_call.1} parent=5 // pred_region
        // Predicated region
        $region61: #{tpu_custom_call.1} parent=59 // pred_check
          %p411 = pneg %p57
        $region62: #{tpu_custom_call.1} parent=59 // pred_check_branch
          %413 = sbr.rel (%p411) target = $region64
        $region63: #{tpu_custom_call.1} parent=59 // pred_region
          %p414 = scmp.lt.s32.totalorder %s30, 1
          %s415 = scalar_select %p414, %s30, 1
          %p416 = scmp.lt.s32.totalorder %s31, 0
          %s417 = scalar_select %p416, %s31, 0
          %s418 = sadd.s32 %s417, %s415
          %s419 = smul.addr %s418, 8
          %s420 = scalar_lea.vmem %s0, %s419
        $region64: #{tpu_custom_call.1} parent=59 // pred_fallthru
          _
        // Predicated region
        $region65: #{tpu_custom_call.1} parent=59 // pred_check
          %p421 = pneg %p83
        $region66: #{tpu_custom_call.1} parent=59 // pred_check_branch
          %423 = sbr.rel (%p421) target = $region68
        $region67: #{tpu_custom_call.1} parent=59 // pred_region
          %p424 = scmp.lt.s32.totalorder %s30, 1
          %s425 = scalar_select %p424, %s30, 1
          %s426 = smul.addr %s425, 8
          %s427 = scalar_lea.vmem %s1, %s426
        $region68: #{tpu_custom_call.1} parent=59 // pred_fallthru
          _
      $region60: #{tpu_custom_call.1} parent=5 // pred_fallthru
        _
      %p428 = scmp.le.s32.totalorder 1, %s23
      %p429 = scmp.lt.s32.totalorder %s23, 3
      %p430 = pnand %p428, %p429
      %p431 = pneg %p430
      // Predicated region
      $region69: #{tpu_custom_call.1} parent=5 // pred_check
        _
      $region70: #{tpu_custom_call.1} parent=5 // pred_check_branch
        %433 = sbr.rel (%p430) target = $region72
      $region71: #{tpu_custom_call.1} parent=5 // pred_region
        %s434 = ssub.s32 %s23, 1
        // Predicated region
        $region73: #{tpu_custom_call.1} parent=71 // pred_check
          %p435 = pneg %p173
        $region74: #{tpu_custom_call.1} parent=71 // pred_check_branch
          %437 = sbr.rel (%p435) target = $region76
        $region75: #{tpu_custom_call.1} parent=71 // pred_region
          %439 = dma.done [#allocation7], 256
        $region76: #{tpu_custom_call.1} parent=71 // pred_fallthru
          _
        %p440 = scmp.lt.s32.totalorder %s32, 1
        %s441 = scalar_select %p440, %s32, 1
        %p442 = scmp.lt.s32.totalorder %s33, 0
        %s443 = scalar_select %p442, %s33, 0
        %s444 = sadd.s32 %s443, %s441
        %s445 = smul.addr %s444, 8
        %s446 = scalar_lea.vmem %s0, %s445
        %p447 = pneg %p63
        %p448 = pneg %p60
        %p449 = scmp.lt.s32.totalorder %s32, 1
        %s450 = scalar_select %p449, %s32, 1
        %s451 = smul.addr %s450, 8
        %s452 = scalar_lea.vmem %s1, %s451
        %p453 = pneg %p89
        %p454 = pneg %p86
        %p455 = pneg %p110
        %p456 = pneg %p107
        %p457 = pneg %p131
        %p458 = pneg %p128
        %p459 = pneg %p152
        %p460 = pneg %p149
        %p461 = pneg %p173
        %p462 = pneg %p170
        %p463 = pneg %p194
        %p464 = pneg %p191
        %p465 = pneg %p215
        %p466 = pneg %p212
        %p467 = pneg %p236
        %p468 = pneg %p233
        %p469 = pneg %p257
        %p470 = pneg %p254
        %p471 = pneg %p278
        %p472 = pneg %p275
        %p473 = pneg %p299
        %p474 = pneg %p296
        %p475 = pneg %p320
        %p476 = pneg %p317
        %p477 = pneg %p348
        %p478 = pneg %p345
        %s479 = sand.u32 %s335, 1
        %s480 = scalar_lea.sflag [#allocation8], %s479
        %s481 = sand.u32 %s335, 1
        %s482 = smul.addr %s481, 8
        %s483 = scalar_lea.vmem [#allocation9], %s482
        %p484 = scmp.lt.s32.totalorder %s32, 1
        %s485 = scalar_select %p484, %s32, 1
        %p486 = scmp.lt.s32.totalorder %s33, 0
        %s487 = scalar_select %p486, %s33, 0
        %s488 = sadd.s32 %s487, %s485
        %s489 = smul.addr %s488, 8
        %s490 = scalar_lea.vmem %s0, %s489
        %p491 = scmp.lt.s32.totalorder %s32, 1
        %s492 = scalar_select %p491, %s32, 1
        %s493 = smul.addr %s492, 8
        %s494 = scalar_lea.vmem %s1, %s493
        %p496 = scmp.eq.s32.totalorder %s33, 0
        // Predicated region
        $region77: #{tpu_custom_call.1} parent=71 // pred_check
          %p497 = pneg %p496
        $region78: #{tpu_custom_call.1} parent=71 // pred_check_branch
          %499 = sbr.rel (%p497) target = $region80
        $region79: #{tpu_custom_call.1} parent=71 // pred_region
          %v500 = vld [vmem:[%s494] sm:$0xff]
          %v501 = vld [vmem:[%s9] sm:$0x1]
          %v502 = vld [vmem:[%s10] sm:$0x1]
          %vm503 = vcmask 261120
          %v504 = vsel %vm503, %v500, 0.0
          %505 = vadd.xlane.f32.xlu0 %v504
          %v506 = vpop.xlane.xlu0 %505
          %v507 = vrcp.pop 32.0
          %v508 = vmul.f32 32.0, %v507
          %v509 = vsub.f32 1.0, %v508
          %v510 = vmul.f32 %v507, %v509
          %v511 = vadd.f32 %v507, %v510
          %vm512 = vweird.f32 %v507
          %v513 = vsel %vm512, %v507, %v511
          %v514 = vmul.f32 %v506, %v513
          %v515 = vsub.f32 %v500, %v514
          %v516 = vmul.f32 %v515, %v515
          %v517 = vsel %vm503, %v516, 0.0
          %518 = vadd.xlane.f32.xlu0 %v517
          %v519 = vpop.xlane.xlu0 %518
          %v520 = vmul.f32 %v519, 0.032258064
          %v521 = vadd.f32 %v520, 1e-05
          %v522 = vrsqrt.pop %v521
          %v523 = vmul.f32 %v522, %v521
          %v524 = vmul.f32 %v523, %v522
          %v525 = vmul.f32 0.5, %v524
          %v526 = vsub.f32 1.5, %v525
          %v527 = vmul.f32 %v522, %v526
          %vm528 = vweird.f32 %v521
          %vm529 = vweird.f32 %v522
          %vm530 = vmor %vm528, %vm529
          %v531 = vsel %vm530, %v522, %v527
          %v532 = vmul.f32 %v515, %v531
          %v534 = vperm.slane %v501, 0
          %v536 = vmul.f32 %v532, %v534
          %v538 = vperm.slane %v502, 0
          %v540 = vadd.f32 %v536, %v538
          %v541 = vpack.c.bf16 %v540, %v540
          %v542 = vld [vmem:[%s3] sm:$0xf]
          %v543 = vld [vmem:[%s3 + $0x4] sm:$0xf]
          %v544 = vld [vmem:[%s3 + $0x8] sm:$0xf]
          %v545 = vld [vmem:[%s3 + $0xc] sm:$0xf]
          %v550 = vunpack.c.l.b16 %v542
          %v551 = vunpack.c.l.b16 %v543
          %v552 = vunpack.c.l.b16 %v544
          %v553 = vunpack.c.l.b16 %v545
          %v554 = vpack.c.b16 %v551, %v550
          %v555 = vpack.c.b16 %v553, %v552
          %v559 = vsel %vm503, %v541, 0
          %561 = vmatpush.bf16.msra.mxu0 0
          %562 = vmatpush.bf16.msra.mxu0 0
          %563 = vmatpush.bf16.msra.mxu0 0
          %564 = vmatpush.bf16.msra.mxu0 0
          %565 = vmatpush.bf16.msra.mxu0 0
          %566 = vmatpush.bf16.msra.mxu0 0
          %567 = vmatpush.bf16.msra.mxu0 %v555
          %568 = vmatpush.bf16.msra.mxu0 %v554
          %569 = vmatmul.bf16.gmra.mxu0 %v559
          %v570 = vpop.f32.mrf.mxu0
          %v571 = vadd.f32 0.0, %v570
          %v572 = vpop.f32.mrf.mxu0
          %573 = vdwg.mxu0
          %v574 = vpack.c.bf16 %v571, %v571
          %vm575 = vcmask 60416
          %576 = vst.msk [vmem:[#allocation3] sm:$0xf] %vm575, %v574
          %578 = vrot.lane.b32.xlu0 %v574, 96
          %v579 = vpop.permute.xlu0 %578
          %581 = vst.msk [vmem:[#allocation4] sm:$0xf] %vm575, %v579
          %582 = vrot.lane.b32.xlu0 %v574, 120
          %v583 = vpop.permute.xlu0 %582
          %s585 = scalar_lea.vmem [#allocation3], 4
          %586 = vst.msk [vmem:[%s585] sm:$0xf] %vm575, %v583
          %587 = vrot.lane.b32.xlu0 %v574, 88
          %v588 = vpop.permute.xlu0 %587
          %s590 = scalar_lea.vmem [#allocation4], 4
          %591 = vst.msk [vmem:[%s590] sm:$0xf] %vm575, %v588
          %592 = vrot.lane.b32.xlu0 %v574, 112
          %v593 = vpop.permute.xlu0 %592
          %s595 = scalar_lea.vmem [#allocation3], 8
          %596 = vst.msk [vmem:[%s595] sm:$0xf] %vm575, %v593
          %597 = vrot.lane.b32.xlu0 %v574, 80
          %v598 = vpop.permute.xlu0 %597
          %s600 = scalar_lea.vmem [#allocation4], 8
          %601 = vst.msk [vmem:[%s600] sm:$0xf] %vm575, %v598
          %602 = vrot.lane.b32.xlu0 %v574, 104
          %v603 = vpop.permute.xlu0 %602
          %s605 = scalar_lea.vmem [#allocation3], 12
          %606 = vst.msk [vmem:[%s605] sm:$0xf] %vm575, %v603
          %607 = vrot.lane.b32.xlu0 %v574, 72
          %v608 = vpop.permute.xlu0 %607
          %s610 = scalar_lea.vmem [#allocation4], 12
          %611 = vst.msk [vmem:[%s610] sm:$0xf] %vm575, %v608
        $region80: #{tpu_custom_call.1} parent=71 // pred_fallthru
          _
        %v612 = vld [vmem:[%s490] sm:$0xff]
        %v613 = vld [vmem:[%s9] sm:$0x1]
        %v614 = vld [vmem:[%s10] sm:$0x1]
        %vm615 = vcmask 261120
        %v616 = vsel %vm615, %v612, 0.0
        %617 = vadd.xlane.f32.xlu0 %v616
        %v618 = vpop.xlane.xlu0 %617
        %v619 = vrcp.pop 32.0
        %v620 = vmul.f32 32.0, %v619
        %v621 = vsub.f32 1.0, %v620
        %v622 = vmul.f32 %v619, %v621
        %v623 = vadd.f32 %v619, %v622
        %vm624 = vweird.f32 %v619
        %v625 = vsel %vm624, %v619, %v623
        %v626 = vmul.f32 %v618, %v625
        %v627 = vsub.f32 %v612, %v626
        %v628 = vmul.f32 %v627, %v627
        %v629 = vsel %vm615, %v628, 0.0
        %630 = vadd.xlane.f32.xlu0 %v629
        %v631 = vpop.xlane.xlu0 %630
        %v632 = vmul.f32 %v631, 0.032258064
        %v633 = vadd.f32 %v632, 1e-05
        %v634 = vrsqrt.pop %v633
        %v635 = vmul.f32 %v634, %v633
        %v636 = vmul.f32 %v635, %v634
        %v637 = vmul.f32 0.5, %v636
        %v638 = vsub.f32 1.5, %v637
        %v639 = vmul.f32 %v634, %v638
        %vm640 = vweird.f32 %v633
        %vm641 = vweird.f32 %v634
        %vm642 = vmor %vm640, %vm641
        %v643 = vsel %vm642, %v634, %v639
        %v644 = vmul.f32 %v627, %v643
        %v646 = vperm.slane %v613, 0
        %v648 = vmul.f32 %v644, %v646
        %v650 = vperm.slane %v614, 0
        %v652 = vadd.f32 %v648, %v650
        %v653 = vpack.c.bf16 %v652, %v652
        %v654 = vld [vmem:[%s2] sm:$0xf]
        %v655 = vld [vmem:[%s2 + $0x4] sm:$0xf]
        %v656 = vld [vmem:[%s2 + $0x8] sm:$0xf]
        %v657 = vld [vmem:[%s2 + $0xc] sm:$0xf]
        %v662 = vunpack.c.l.b16 %v654
        %v663 = vunpack.c.l.b16 %v655
        %v664 = vunpack.c.l.b16 %v656
        %v665 = vunpack.c.l.b16 %v657
        %v666 = vpack.c.b16 %v663, %v662
        %v667 = vpack.c.b16 %v665, %v664
        %v671 = vsel %vm615, %v653, 0
        %673 = vmatpush.bf16.msra.mxu0 0
        %674 = vmatpush.bf16.msra.mxu0 0
        %675 = vmatpush.bf16.msra.mxu0 0
        %676 = vmatpush.bf16.msra.mxu0 0
        %677 = vmatpush.bf16.msra.mxu0 0
        %678 = vmatpush.bf16.msra.mxu0 0
        %679 = vmatpush.bf16.msra.mxu0 %v667
        %680 = vmatpush.bf16.msra.mxu0 %v666
        %681 = vmatmul.bf16.gmra.mxu0 %v671
        %v682 = vpop.f32.mrf.mxu0
        %v683 = vadd.f32 0.0, %v682
        %v684 = vpop.f32.mrf.mxu0
        %685 = vdwg.mxu0
        %v686 = vmul.f32 %v683, 0.35355338
        %v687 = vpack.c.bf16 %v686, %v686
        %vm688 = vcmask 60416
        %689 = vst.msk [vmem:[#allocation2] sm:$0xf] %vm688, %v687
        %691 = vrot.lane.b32.xlu0 %v687, 120
        %v692 = vpop.permute.xlu0 %691
        %s694 = scalar_lea.vmem [#allocation2], 4
        %695 = vst.msk [vmem:[%s694] sm:$0xf] %vm688, %v692
        %696 = vrot.lane.b32.xlu0 %v687, 112
        %v697 = vpop.permute.xlu0 %696
        %s699 = scalar_lea.vmem [#allocation2], 8
        %700 = vst.msk [vmem:[%s699] sm:$0xf] %vm688, %v697
        %701 = vrot.lane.b32.xlu0 %v687, 104
        %v702 = vpop.permute.xlu0 %701
        %s704 = scalar_lea.vmem [#allocation2], 12
        %705 = vst.msk [vmem:[%s704] sm:$0xf] %vm688, %v702
        %s706 = smul.u32 %s33, 8
        %v707 = vlaneseq
        %v708 = vshrl.u32 %v707, 7
        %v709 = vstv %s706
        %v710 = vadd.s32 %v708, %v709
        %v711 = vlaneseq
        %v712 = vand.u32 %v711, 127
        %vm713 = vcmp.gt.s32.totalorder %v712, %v710
        %714 = vst.msk [vmem:[#allocation5] sm:$0xff] %vm615, 0.0
        loop: start=0, step=1, limit=4
        $region81: #{tpu_custom_call.1} parent=71 // loop_pre_header
          _
        $region82: #{tpu_custom_call.1} parent=71 // loop_header
          %s716 = sphi 0, %s720
          %p717 = scmp.ge.s32.totalorder %s716, 4
        $region83: #{tpu_custom_call.1} parent=71 // loop_header_branch
          %719 = sbr.rel (%p717) target = $region87
        $region84: #{tpu_custom_call.1} parent=71 // loop_body
          %s721 = smul.addr %s716, 4
          %s722 = scalar_lea.vmem [#allocation2], %s721
          %v723 = vld [vmem:[%s722] sm:$0xf]
          %s724 = smul.addr %s716, 4
          %s725 = scalar_lea.vmem [#allocation3], %s724
          %v726 = vld [vmem:[%s725] sm:$0xf]
          %s727 = smul.addr %s716, 4
          %s728 = scalar_lea.vmem [#allocation4], %s727
          %v729 = vld [vmem:[%s728] sm:$0xf]
          %vm730 = vcmask 64512
          %v732 = vsel %vm730, %v723, 0
          %v735 = vsel %vm730, %v726, 0
          %737 = vmatpush.bf16.xpose.msra.mxu0 0
          %738 = vmatpush.bf16.xpose.msra.mxu0 0
          %739 = vmatpush.bf16.xpose.msra.mxu0 0
          %740 = vmatpush.bf16.xpose.msra.mxu0 0
          %741 = vmatpush.bf16.xpose.msra.mxu0 0
          %742 = vmatpush.bf16.xpose.msra.mxu0 0
          %743 = vmatpush.bf16.xpose.msra.mxu0 0
          %744 = vmatpush.bf16.xpose.msra.mxu0 %v735
          %745 = vmatmul.bf16.gmra.mxu0 %v732
          %v746 = vpop.f32.mrf.mxu0
          %v747 = vadd.f32 0.0, %v746
          %v748 = vpop.f32.mrf.mxu0
          %749 = vdwg.mxu0
          %v750 = vsel %vm713, -1e+30, %v747
          %v751 = vsel %vm730, %v750, -inf
          %752 = vmax.xlane.f32.xlu0 %v751
          %v753 = vpop.xlane.xlu0 %752
          %v754 = vsub.f32 %v750, %v753
          %v755 = vmul.f32 %v754, 1.442695
          %v756 = vpow.pop %v755
          %v757 = vsel %vm730, %v756, 0.0
          %758 = vadd.xlane.f32.xlu0 %v757
          %v759 = vpop.xlane.xlu0 %758
          %v760 = vpack.c.bf16 %v756, %v756
          %v762 = vsel %vm730, %v760, 0
          %vm764 = vcmask 1043456
          %v766 = vsel %vm764, %v729, 0
          %768 = vmatpush.bf16.msra.mxu0 0
          %769 = vmatpush.bf16.msra.mxu0 0
          %770 = vmatpush.bf16.msra.mxu0 0
          %771 = vmatpush.bf16.msra.mxu0 0
          %772 = vmatpush.bf16.msra.mxu0 0
          %773 = vmatpush.bf16.msra.mxu0 0
          %774 = vmatpush.bf16.msra.mxu0 0
          %775 = vmatpush.bf16.msra.mxu0 %v766
          %776 = vmatmul.bf16.gmra.mxu0 %v762
          %v777 = vpop.f32.mrf.mxu0
          %v778 = vadd.f32 0.0, %v777
          %v779 = vpop.f32.mrf.mxu0
          %780 = vdwg.mxu0
          %v781 = vrcp.pop %v759
          %v782 = vmul.f32 %v778, %v781
          %v783 = vld [vmem:[#allocation5] sm:$0xff]
          %v784 = vpack.c.bf16 %v782, %v782
          %s785 = smul.addr %s716, 4
          %s786 = scalar_lea.vmem %s4, %s785
          %v787 = vld [vmem:[%s786] sm:$0xf]
          %v789 = vsel %vm730, %v784, 0
          %v792 = vsel %vm764, %v787, 0
          %794 = vmatpush.bf16.msra.mxu0 0
          %795 = vmatpush.bf16.msra.mxu0 0
          %796 = vmatpush.bf16.msra.mxu0 0
          %797 = vmatpush.bf16.msra.mxu0 0
          %798 = vmatpush.bf16.msra.mxu0 0
          %799 = vmatpush.bf16.msra.mxu0 0
          %800 = vmatpush.bf16.msra.mxu0 0
          %801 = vmatpush.bf16.msra.mxu0 %v792
          %802 = vmatmul.bf16.gmra.mxu0 %v789
          %v803 = vpop.f32.mrf.mxu0
          %v804 = vadd.f32 0.0, %v803
          %v805 = vpop.f32.mrf.mxu0
          %806 = vdwg.mxu0
          %v807 = vadd.f32 %v783, %v804
          %808 = vst.msk [vmem:[#allocation5] sm:$0xff] %vm615, %v807
        $region85: #{tpu_custom_call.1} parent=71 // loop_footer
          %s720 = sadd.s32 1, %s716
        $region86: #{tpu_custom_call.1} parent=71 // loop_footer_branch
          %715 = sbr.rel target = $region82
        $region87: #{tpu_custom_call.1} parent=71 // loop_exit
          _
        %v809 = vld [vmem:[#allocation5] sm:$0xff]
        %v810 = vadd.f32 %v612, %v809
        %v811 = vld [vmem:[%s11] sm:$0x1]
        %v812 = vld [vmem:[%s12] sm:$0x1]
        %v813 = vsel %vm615, %v810, 0.0
        %814 = vadd.xlane.f32.xlu0 %v813
        %v815 = vpop.xlane.xlu0 %814
        %v816 = vmul.f32 %v815, %v625
        %v817 = vsub.f32 %v810, %v816
        %v818 = vmul.f32 %v817, %v817
        %v819 = vsel %vm615, %v818, 0.0
        %820 = vadd.xlane.f32.xlu0 %v819
        %v821 = vpop.xlane.xlu0 %820
        %v822 = vmul.f32 %v821, 0.032258064
        %v823 = vadd.f32 %v822, 1e-05
        %v824 = vrsqrt.pop %v823
        %v825 = vmul.f32 %v824, %v823
        %v826 = vmul.f32 %v825, %v824
        %v827 = vmul.f32 0.5, %v826
        %v828 = vsub.f32 1.5, %v827
        %v829 = vmul.f32 %v824, %v828
        %vm830 = vweird.f32 %v823
        %vm831 = vweird.f32 %v824
        %vm832 = vmor %vm830, %vm831
        %v833 = vsel %vm832, %v824, %v829
        %v834 = vmul.f32 %v817, %v833
        %v836 = vperm.slane %v811, 0
        %v838 = vmul.f32 %v834, %v836
        %v840 = vperm.slane %v812, 0
        %v842 = vadd.f32 %v838, %v840
        %v843 = vpack.c.bf16 %v842, %v842
        %v844 = vld [vmem:[#allocation6] sm:$0xf]
        %v845 = vld [vmem:[#allocation6 + $0x4] sm:$0xf]
        %v846 = vld [vmem:[#allocation6 + $0x8] sm:$0xf]
        %v847 = vld [vmem:[#allocation6 + $0xc] sm:$0xf]
        %v848 = vld [vmem:[%s6] sm:$0x1]
        %v850 = vperm.slane %v848, 0
        %v856 = vunpack.c.l.b16 %v844
        %v857 = vunpack.c.l.b16 %v845
        %v858 = vunpack.c.l.b16 %v846
        %v859 = vunpack.c.l.b16 %v847
        %v860 = vpack.c.b16 %v857, %v856
        %v861 = vpack.c.b16 %v859, %v858
        %v865 = vsel %vm615, %v843, 0
        %867 = vmatpush.bf16.msra.mxu0 0
        %868 = vmatpush.bf16.msra.mxu0 0
        %869 = vmatpush.bf16.msra.mxu0 0
        %870 = vmatpush.bf16.msra.mxu0 0
        %871 = vmatpush.bf16.msra.mxu0 0
        %872 = vmatpush.bf16.msra.mxu0 0
        %873 = vmatpush.bf16.msra.mxu0 %v861
        %874 = vmatpush.bf16.msra.mxu0 %v860
        %875 = vmatmul.bf16.gmra.mxu0 %v865
        %v876 = vpop.f32.mrf.mxu0
        %v877 = vadd.f32 %v850, %v876
        %v878 = vpop.f32.mrf.mxu0
        %879 = vdwg.mxu0
        %v880 = vmul.f32 %v877, 0.5
        %v881 = vmul.f32 %v877, 0.044715
        %v882 = vmul.f32 %v881, %v877
        %v883 = vmul.f32 %v882, %v877
        %v884 = vadd.f32 %v877, %v883
        %v885 = vmul.f32 %v884, 0.7978846
        %v886 = vtanh.pop %v885
        %v887 = vadd.f32 %v886, 1.0
        %v888 = vmul.f32 %v880, %v887
        %v889 = vpack.c.bf16 %v888, %v888
        %v890 = vld [vmem:[%s7] sm:$0xf]
        %v891 = vld [vmem:[%s7 + $0x4] sm:$0xf]
        %v892 = vld [vmem:[%s7 + $0x8] sm:$0xf]
        %v893 = vld [vmem:[%s7 + $0xc] sm:$0xf]
        %v894 = vld [vmem:[%s7 + $0x10] sm:$0xf]
        %v895 = vld [vmem:[%s7 + $0x14] sm:$0xf]
        %v896 = vld [vmem:[%s7 + $0x18] sm:$0xf]
        %v897 = vld [vmem:[%s7 + $0x1c] sm:$0xf]
        %v898 = vld [vmem:[%s7 + $0x20] sm:$0xf]
        %v899 = vld [vmem:[%s7 + $0x24] sm:$0xf]
        %v900 = vld [vmem:[%s7 + $0x28] sm:$0xf]
        %v901 = vld [vmem:[%s7 + $0x2c] sm:$0xf]
        %v902 = vld [vmem:[%s7 + $0x30] sm:$0xf]
        %v903 = vld [vmem:[%s7 + $0x34] sm:$0xf]
        %v904 = vld [vmem:[%s7 + $0x38] sm:$0xf]
        %v905 = vld [vmem:[%s7 + $0x3c] sm:$0xf]
        %v906 = vld [vmem:[%s8] sm:$0x1]
        %v908 = vperm.slane %v906, 0
        %v926 = vunpack.c.l.b16 %v890
        %v927 = vunpack.c.l.b16 %v891
        %v928 = vunpack.c.l.b16 %v892
        %v929 = vunpack.c.l.b16 %v893
        %v930 = vunpack.c.l.b16 %v894
        %v931 = vunpack.c.l.b16 %v895
        %v932 = vunpack.c.l.b16 %v896
        %v933 = vunpack.c.l.b16 %v897
        %v934 = vunpack.c.l.b16 %v898
        %v935 = vunpack.c.l.b16 %v899
        %v936 = vunpack.c.l.b16 %v900
        %v937 = vunpack.c.l.b16 %v901
        %v938 = vunpack.c.l.b16 %v902
        %v939 = vunpack.c.l.b16 %v903
        %v940 = vunpack.c.l.b16 %v904
        %v941 = vunpack.c.l.b16 %v905
        %v942 = vpack.c.b16 %v927, %v926
        %v943 = vpack.c.b16 %v929, %v928
        %v944 = vpack.c.b16 %v931, %v930
        %v945 = vpack.c.b16 %v933, %v932
        %v946 = vpack.c.b16 %v935, %v934
        %v947 = vpack.c.b16 %v937, %v936
        %v948 = vpack.c.b16 %v939, %v938
        %v949 = vpack.c.b16 %v941, %v940
        %958 = vmatpush.bf16.msra.mxu0 %v949
        %959 = vmatpush.bf16.msra.mxu0 %v948
        %960 = vmatpush.bf16.msra.mxu0 %v947
        %961 = vmatpush.bf16.msra.mxu0 %v946
        %962 = vmatpush.bf16.msra.mxu0 %v945
        %963 = vmatpush.bf16.msra.mxu0 %v944
        %964 = vmatpush.bf16.msra.mxu0 %v943
        %965 = vmatpush.bf16.msra.mxu0 %v942
        %966 = vmatmul.bf16.gmra.mxu0 %v889
        %v967 = vpop.f32.mrf.mxu0
        %v968 = vadd.f32 %v908, %v967
        %v969 = vpop.f32.mrf.mxu0
        %970 = vdwg.mxu0
        %v971 = vadd.f32 %v810, %v968
        %972 = vst.msk [vmem:[%s483] sm:$0xff] %vm615, %v971
        %s973 = sand.u32 %s335, 1
        %s974 = scalar_lea.sflag [#allocation8], %s973
        %s975 = sand.u32 %s335, 1
        %s976 = smul.addr %s975, 8
        %s977 = scalar_lea.vmem [#allocation9], %s976
        // Predicated region
        $region88: #{tpu_custom_call.1} parent=71 // pred_check
          %p978 = pneg %p345
        $region89: #{tpu_custom_call.1} parent=71 // pred_check_branch
          %980 = sbr.rel (%p978) target = $region91
        $region90: #{tpu_custom_call.1} parent=71 // pred_region
          %982 = vsyncadd %s974, 0
          %s983 = sadd.s32 %s33, %s32
          %s984 = smul.addr %s983, 8
          %s985 = scalar_lea.hbm %s13, %s984
          %s987 = sshll.u32 %s977, 4
          %s988 = int_to_ptr.vmem [resolvable:$true] %s987
          %s989 = sshll.u32 %s985, 4
          %s990 = int_to_ptr.hbm [resolvable:$true] %s989
          %992 = dma.vmem_to_hbm [thread:$0]  %s988, 128, %s990, %s974
        $region91: #{tpu_custom_call.1} parent=71 // pred_fallthru
          _
      $region72: #{tpu_custom_call.1} parent=5 // pred_fallthru
        _
      %p993 = scmp.le.s32.totalorder 2, %s23
      // Predicated region
      $region92: #{tpu_custom_call.1} parent=5 // pred_check
        %p994 = pneg %p993
      $region93: #{tpu_custom_call.1} parent=5 // pred_check_branch
        %996 = sbr.rel (%p994) target = $region95
      $region94: #{tpu_custom_call.1} parent=5 // pred_region
        %s997 = ssub.s32 %s23, 2
        // Predicated region
        $region96: #{tpu_custom_call.1} parent=94 // pred_check
          %p998 = pneg %p351
        $region97: #{tpu_custom_call.1} parent=94 // pred_check_branch
          %1000 = sbr.rel (%p998) target = $region99
        $region98: #{tpu_custom_call.1} parent=94 // pred_region
          %s1001 = sand.u32 %s336, 1
          %s1002 = scalar_lea.sflag [#allocation8], %s1001
          %s1003 = sand.u32 %s336, 1
          %s1004 = smul.addr %s1003, 8
          %s1005 = scalar_lea.vmem [#allocation9], %s1004
          %1007 = dma.done %s1002, 128
        $region99: #{tpu_custom_call.1} parent=94 // pred_fallthru
          _
      $region95: #{tpu_custom_call.1} parent=5 // pred_fallthru
        _
    $region6: #{tpu_custom_call.1} parent=1 // loop_footer
      %s27 = sadd.s32 1, %s23
    $region7: #{tpu_custom_call.1} parent=1 // loop_footer_branch
      %22 = sbr.rel target = $region3
    $region8: #{tpu_custom_call.1} parent=1 // loop_exit
      _
    %1008 = vsyncpa [#allocation7], 1
    %s1009 = scalar_lea.sflag [#allocation7], 1
    %1010 = vsyncpa %s1009, 1
    %1011 = vsyncpa [#allocation8], 1
    %s1012 = scalar_lea.sflag [#allocation8], 1
    %1013 = vsyncpa %s1012, 1

</llo_original>
